<compile_context>
chip_gen: v5e
topology: v5e:2x2
jax: 0.10.0
libtpu: 0.0.40
codegen_flags: <defaults>
</compile_context>

<pallas_src>
import functools

import jax
import jax.numpy as jnp
from jax.experimental import pallas as pl
from jax.experimental.pallas import tpu as pltpu

NUM_CLASSES = 18
NUM_LAYERS = 2
HIDDEN_SIZE = 32          # small, consistent with the module (original: 256)
LSTM_INPUT_SIZE = 16
SEQ_LEN = 8
BATCH = 4

LANE = 128                # lane-padded width of every packed slab row
BATCH_PAD = 8             # one sublane tile

# Row offsets of each weight block inside the packed (144,128) weight slab.
# All offsets are multiples of 16 -> aligned to bf16-packed (16,128) tiles.
R_IH0 = 0
R_HH0 = R_IH0 + LSTM_INPUT_SIZE           # 16
R_IH1 = R_HH0 + HIDDEN_SIZE               # 48
R_HH1 = R_IH1 + HIDDEN_SIZE               # 80
R_FC = R_HH1 + HIDDEN_SIZE                # 112
W_ROWS = R_FC + HIDDEN_SIZE               # 144


# ----------------------------------------------------------------------------
# Single fused kernel: both GRU layers + FC.  No grid; everything in VMEM.
# ----------------------------------------------------------------------------
def fused_rnn_kernel(x_ref, h0_ref, w_ref, b_ref,
                     dec_ref, hout_ref,
                     out1_scr, *, seq_len):
    H = HIDDEN_SIZE
    bf = jnp.bfloat16

    # ---- unpack the two parameter slabs (static, tile-aligned slices) ----
    w_ih0 = w_ref[R_IH0:R_HH0, :]          # (I0, 128) bf16, cols [r|z|n|0]
    w_hh0 = w_ref[R_HH0:R_IH1, :]          # (H, 128)  bf16
    w_ih1 = w_ref[R_IH1:R_HH1, :]          # (H, 128)  bf16
    w_hh1 = w_ref[R_HH1:R_FC, :]           # (H, 128)  bf16
    w_fc = w_ref[R_FC:W_ROWS, :]           # (H, 128)  bf16

    bias_i0 = b_ref[0:1, :]                # [b_ir+b_hr | b_iz+b_hz | b_in | 0]
    bias_hn0 = b_ref[1:2, :]               # [0 | 0 | b_hn | 0]
    bias_i1 = b_ref[2:3, :]
    bias_hn1 = b_ref[3:4, :]
    fc_b = b_ref[4:5, :]                   # [fc_b | 0]

    # ---- layer-0 input-gate matmul, hoisted for ALL timesteps at once ----
    x_bf = x_ref[...].astype(bf)                                   # (S*Bp, I0)
    gi0 = jnp.dot(x_bf, w_ih0, preferred_element_type=jnp.float32) + bias_i0

    def gru_step(gi_t, gh, h):
        # gi_t, gh: (Bp, 128) f32 with r|z|n packed in lanes; h: (Bp, H) f32.
        # gi_t already contains (b_ir+b_hr, b_iz+b_hz, b_in); gh contains b_hn.
        r = jax.nn.sigmoid(gi_t[:, :H] + gh[:, :H])
        z = jax.nn.sigmoid(gi_t[:, H:2 * H] + gh[:, H:2 * H])
        n = jnp.tanh(gi_t[:, 2 * H:3 * H] + r * gh[:, 2 * H:3 * H])
        return n + z * (h - n)

    h0 = h0_ref[0]                         # (Bp, H) f32
    h1 = h0_ref[1]

    # Fully-unrolled wavefront: layer-1 step t depends only on layer-0 step t,
    # so the LLO scheduler overlaps layer-1's work with layer-0's step t+1.
    for t in range(seq_len):
        lo = t * BATCH_PAD
        # ---- layer 0, step t: one fused (H,3H) recurrent matmul ----
        gh0 = jnp.dot(h0.astype(bf), w_hh0,
                      preferred_element_type=jnp.float32) + bias_hn0
        h0 = gru_step(gi0[lo:lo + BATCH_PAD, :], gh0, h0)

        # ---- layer 1, step t (input-gate matmul on the fresh h0 value) ----
        h0_bf = h0.astype(bf)
        gi1_t = jnp.dot(h0_bf, w_ih1,
                        preferred_element_type=jnp.float32) + bias_i1
        gh1 = jnp.dot(h1.astype(bf), w_hh1,
                      preferred_element_type=jnp.float32) + bias_hn1
        h1 = gru_step(gi1_t, gh1, h1)
        out1_scr[lo:lo + BATCH_PAD, :] = h1      # sublane-aligned store

    # ---- final FC over the full (S*Bp, H) slab; lane-dense 128-wide out ----
    dec_ref[...] = jnp.dot(out1_scr[...].astype(bf), w_fc,
                           preferred_element_type=jnp.float32) + fc_b
    hout_ref[0] = h0
    hout_ref[1] = h1


def rnn_forward(x, hidden, pp):
    """x: (S, B, I), hidden: (NUM_LAYERS, B, H) -> (decoder, new_hidden)."""
    S, B, I = x.shape
    H = HIDDEN_SIZE

    # Pad batch to one sublane tile (8); padded rows are zero and sliced away.
    x_pad = jnp.zeros((S, BATCH_PAD, I), x.dtype).at[:, :B, :].set(x)
    h_pad = (jnp.zeros((NUM_LAYERS, BATCH_PAD, H), hidden.dtype)
             .at[:, :B, :].set(hidden))

    kernel = functools.partial(fused_rnn_kernel, seq_len=S)
    dec_pad, h_out = pl.pallas_call(
        kernel,
        out_shape=(jax.ShapeDtypeStruct((S * BATCH_PAD, LANE), jnp.float32),
                   jax.ShapeDtypeStruct((NUM_LAYERS, BATCH_PAD, H),
                                        jnp.float32)),
        scratch_shapes=[pltpu.VMEM((S * BATCH_PAD, H), jnp.float32)],
    )(x_pad.reshape(S * BATCH_PAD, I), h_pad, pp["w"], pp["b"])

    decoder = dec_pad.reshape(S, BATCH_PAD, LANE)[:, :B, :NUM_CLASSES]
    new_hidden = h_out[:, :B, :]
    return decoder, new_hidden


# ----------------------------------------------------------------------------
# Parameter prep: done ONCE (outside the jitted forward).
#   - transpose PyTorch (3H, in) weights to (in, 3H) [columns = r|z|n blocks]
#   - lane-pad every block to 128 and row-stack into ONE bf16 weight slab
#   - pre-sum b_ir+b_hr / b_iz+b_hz; pack all biases into ONE f32 (8,128) slab
#   - fc weight transposed + lane-padded; fc bias lane-padded
# ----------------------------------------------------------------------------
def prepare_params(raw):
    H = HIDDEN_SIZE
    w_blocks = []
    b_rows = []
    for p in raw["gru"]:
        w_ih, w_hh = p["w_ih"], p["w_hh"]          # (3H, in), (3H, H)
        b_ih, b_hh = p["b_ih"], p["b_hh"]          # (3H,), (3H,)
        wih_t = jnp.transpose(w_ih)                # (in, 3H): cols r|z|n
        whh_t = jnp.transpose(w_hh)                # (H, 3H)
        w_blocks.append(jnp.zeros((wih_t.shape[0], LANE), jnp.float32)
                        .at[:, :3 * H].set(wih_t))
        w_blocks.append(jnp.zeros((H, LANE), jnp.float32)
                        .at[:, :3 * H].set(whh_t))
        bias_i = (jnp.zeros((LANE,), jnp.float32)
                  .at[:2 * H].set(b_ih[:2 * H] + b_hh[:2 * H])
                  .at[2 * H:3 * H].set(b_ih[2 * H:]))
        bias_hn = (jnp.zeros((LANE,), jnp.float32)
                   .at[2 * H:3 * H].set(b_hh[2 * H:]))
        b_rows.extend([bias_i, bias_hn])

    fc_w_t = jnp.transpose(raw["fc_w"])            # (H, C)
    w_blocks.append(jnp.zeros((H, LANE), jnp.float32)
                    .at[:, :NUM_CLASSES].set(fc_w_t))
    b_rows.append(jnp.zeros((LANE,), jnp.float32)
                  .at[:NUM_CLASSES].set(raw["fc_b"]))

    w_slab = jnp.concatenate(w_blocks, axis=0)
    assert w_slab.shape == (W_ROWS, LANE)
    b_slab = (jnp.zeros((8, LANE), jnp.float32)
              .at[:len(b_rows)].set(jnp.stack(b_rows)))
    return {"w": w_slab.astype(jnp.bfloat16), "b": b_slab}


# ----------------------------------------------------------------------------
# Deterministic parameter init (xavier-uniform-ish with tanh gain, like
# RNN.init_weights; fc bias = 0).
# ----------------------------------------------------------------------------
def xavier_uniform(key, shape, gain):
    fan_out, fan_in = shape[0], shape[1]
    bound = gain * jnp.sqrt(6.0 / (fan_in + fan_out))
    return jax.random.uniform(key, shape, jnp.float32, -bound, bound)


def init_params(key):
    gain = 5.0 / 3.0  # tanh gain
    params = {"gru": []}
    for layer in range(NUM_LAYERS):
        in_size = LSTM_INPUT_SIZE if layer == 0 else HIDDEN_SIZE
        key, k1, k2, k3, k4 = jax.random.split(key, 5)
        params["gru"].append({
            "w_ih": xavier_uniform(k1, (3 * HIDDEN_SIZE, in_size), gain),
            "w_hh": xavier_uniform(k2, (3 * HIDDEN_SIZE, HIDDEN_SIZE), gain),
            "b_ih": jax.random.uniform(k3, (3 * HIDDEN_SIZE,), jnp.float32,
                                       -0.1, 0.1),
            "b_hh": jax.random.uniform(k4, (3 * HIDDEN_SIZE,), jnp.float32,
                                       -0.1, 0.1),
        })
    key, kf = jax.random.split(key)
    params["fc_w"] = xavier_uniform(kf, (NUM_CLASSES, HIDDEN_SIZE), gain)
    params["fc_b"] = jnp.zeros((NUM_CLASSES,), jnp.float32)
    return params


if __name__ == "__main__":
    key = jax.random.PRNGKey(0)
    key, kx = jax.random.split(key)
    raw_params = init_params(key)
    params = prepare_params(raw_params)     # one-time weight prep, not per call

    x = jax.random.normal(kx, (SEQ_LEN, BATCH, LSTM_INPUT_SIZE), jnp.float32)
    hidden0 = jnp.zeros((NUM_LAYERS, BATCH, HIDDEN_SIZE), jnp.float32)

    decoder, new_hidden = jax.jit(rnn_forward)(x, hidden0, params)
    jax.block_until_ready((decoder, new_hidden))

    assert decoder.shape == (SEQ_LEN, BATCH, NUM_CLASSES)
    assert new_hidden.shape == (NUM_LAYERS, BATCH, HIDDEN_SIZE)
    print("KERNEL_OK")
</pallas_src>

<mosaic_0001>
module attributes {stable_mosaic.version = 11 : i64} {
  func.func @fused_rnn_kernel(%arg0: memref<64x16xf32, #tpu.memory_space<vmem>>, %arg1: memref<2x8x32xf32, #tpu.memory_space<vmem>>, %arg2: memref<144x128xbf16, #tpu.memory_space<vmem>>, %arg3: memref<8x128xf32, #tpu.memory_space<vmem>>, %arg4: memref<64x128xf32, #tpu.memory_space<vmem>>, %arg5: memref<2x8x32xf32, #tpu.memory_space<vmem>>, %arg6: memref<64x32xf32, #tpu.memory_space<vmem>>) attributes {dimension_semantics = [], scalar_prefetch = 0 : i64, scratch_operands = 1 : i64, tpu.core_type = #tpu.core_type<tc>} {
    %c0 = arith.constant 0 : index
    %c0_0 = arith.constant 0 : index
    %0 = vector.load %arg2[%c0, %c0_0] : memref<144x128xbf16, #tpu.memory_space<vmem>>, vector<16x128xbf16>
    %c16 = arith.constant 16 : index
    %c0_1 = arith.constant 0 : index
    %1 = vector.load %arg2[%c16, %c0_1] : memref<144x128xbf16, #tpu.memory_space<vmem>>, vector<32x128xbf16>
    %c48 = arith.constant 48 : index
    %c0_2 = arith.constant 0 : index
    %2 = vector.load %arg2[%c48, %c0_2] : memref<144x128xbf16, #tpu.memory_space<vmem>>, vector<32x128xbf16>
    %c80 = arith.constant 80 : index
    %c0_3 = arith.constant 0 : index
    %3 = vector.load %arg2[%c80, %c0_3] : memref<144x128xbf16, #tpu.memory_space<vmem>>, vector<32x128xbf16>
    %c112 = arith.constant 112 : index
    %c0_4 = arith.constant 0 : index
    %4 = vector.load %arg2[%c112, %c0_4] : memref<144x128xbf16, #tpu.memory_space<vmem>>, vector<32x128xbf16>
    %c0_5 = arith.constant 0 : index
    %c0_6 = arith.constant 0 : index
    %5 = vector.load %arg3[%c0_5, %c0_6] : memref<8x128xf32, #tpu.memory_space<vmem>>, vector<1x128xf32>
    %c1 = arith.constant 1 : index
    %c0_7 = arith.constant 0 : index
    %6 = vector.load %arg3[%c1, %c0_7] : memref<8x128xf32, #tpu.memory_space<vmem>>, vector<1x128xf32>
    %c2 = arith.constant 2 : index
    %c0_8 = arith.constant 0 : index
    %7 = vector.load %arg3[%c2, %c0_8] : memref<8x128xf32, #tpu.memory_space<vmem>>, vector<1x128xf32>
    %c3 = arith.constant 3 : index
    %c0_9 = arith.constant 0 : index
    %8 = vector.load %arg3[%c3, %c0_9] : memref<8x128xf32, #tpu.memory_space<vmem>>, vector<1x128xf32>
    %c4 = arith.constant 4 : index
    %c0_10 = arith.constant 0 : index
    %9 = vector.load %arg3[%c4, %c0_10] : memref<8x128xf32, #tpu.memory_space<vmem>>, vector<1x128xf32>
    %c0_11 = arith.constant 0 : index
    %c0_12 = arith.constant 0 : index
    %10 = vector.load %arg0[%c0_11, %c0_12] : memref<64x16xf32, #tpu.memory_space<vmem>>, vector<64x16xf32>
    %11 = arith.truncf %10 : vector<64x16xf32> to vector<64x16xbf16>
    %cst = arith.constant dense<0.000000e+00> : vector<64x128xf32>
    %12 = tpu.matmul %11, %0, %cst {dimension_numbers = #tpu.dot_dimension_numbers<[1], [0], [0], [1], [0, 0, 1, 1], [], []>} : vector<64x16xbf16>, vector<16x128xbf16>, vector<64x128xf32> -> vector<64x128xf32>
    %13 = vector.broadcast %5 : vector<1x128xf32> to vector<64x128xf32>
    %14 = arith.addf %12, %13 : vector<64x128xf32>
    %c0_13 = arith.constant 0 : index
    %c0_14 = arith.constant 0 : index
    %c0_15 = arith.constant 0 : index
    %15 = vector.load %arg1[%c0_13, %c0_14, %c0_15] : memref<2x8x32xf32, #tpu.memory_space<vmem>>, vector<1x8x32xf32>
    %16 = vector.shape_cast %15 : vector<1x8x32xf32> to vector<8x32xf32>
    %c1_16 = arith.constant 1 : index
    %c0_17 = arith.constant 0 : index
    %c0_18 = arith.constant 0 : index
    %17 = vector.load %arg1[%c1_16, %c0_17, %c0_18] : memref<2x8x32xf32, #tpu.memory_space<vmem>>, vector<1x8x32xf32>
    %18 = vector.shape_cast %17 : vector<1x8x32xf32> to vector<8x32xf32>
    %19 = arith.truncf %16 : vector<8x32xf32> to vector<8x32xbf16>
    %cst_19 = arith.constant dense<0.000000e+00> : vector<8x128xf32>
    %20 = tpu.matmul %19, %1, %cst_19 {dimension_numbers = #tpu.dot_dimension_numbers<[1], [0], [0], [1], [0, 0, 1, 1], [], []>} : vector<8x32xbf16>, vector<32x128xbf16>, vector<8x128xf32> -> vector<8x128xf32>
    %21 = vector.broadcast %6 : vector<1x128xf32> to vector<8x128xf32>
    %22 = arith.addf %20, %21 : vector<8x128xf32>
    %23 = vector.extract_strided_slice %14 {offsets = [0, 0], sizes = [8, 128], strides = [1, 1]} : vector<64x128xf32> to vector<8x128xf32>
    %24 = vector.extract_strided_slice %23 {offsets = [0, 0], sizes = [8, 32], strides = [1, 1]} : vector<8x128xf32> to vector<8x32xf32>
    %25 = vector.extract_strided_slice %22 {offsets = [0, 0], sizes = [8, 32], strides = [1, 1]} : vector<8x128xf32> to vector<8x32xf32>
    %26 = arith.addf %24, %25 : vector<8x32xf32>
    %27 = arith.negf %26 : vector<8x32xf32>
    %28 = math.exp %27 : vector<8x32xf32>
    %cst_20 = arith.constant 1.000000e+00 : f32
    %29 = vector.broadcast %cst_20 : f32 to vector<8x32xf32>
    %30 = arith.addf %29, %28 : vector<8x32xf32>
    %31 = arith.divf %29, %30 : vector<8x32xf32>
    %32 = vector.extract_strided_slice %23 {offsets = [0, 32], sizes = [8, 32], strides = [1, 1]} : vector<8x128xf32> to vector<8x32xf32>
    %33 = vector.extract_strided_slice %22 {offsets = [0, 32], sizes = [8, 32], strides = [1, 1]} : vector<8x128xf32> to vector<8x32xf32>
    %34 = arith.addf %32, %33 : vector<8x32xf32>
    %35 = arith.negf %34 : vector<8x32xf32>
    %36 = math.exp %35 : vector<8x32xf32>
    %cst_21 = arith.constant 1.000000e+00 : f32
    %37 = vector.broadcast %cst_21 : f32 to vector<8x32xf32>
    %38 = arith.addf %37, %36 : vector<8x32xf32>
    %39 = arith.divf %37, %38 : vector<8x32xf32>
    %40 = vector.extract_strided_slice %23 {offsets = [0, 64], sizes = [8, 32], strides = [1, 1]} : vector<8x128xf32> to vector<8x32xf32>
    %41 = vector.extract_strided_slice %22 {offsets = [0, 64], sizes = [8, 32], strides = [1, 1]} : vector<8x128xf32> to vector<8x32xf32>
    %42 = arith.mulf %31, %41 : vector<8x32xf32>
    %43 = arith.addf %40, %42 : vector<8x32xf32>
    %44 = math.tanh %43 : vector<8x32xf32>
    %45 = arith.subf %16, %44 : vector<8x32xf32>
    %46 = arith.mulf %39, %45 : vector<8x32xf32>
    %47 = arith.addf %44, %46 : vector<8x32xf32>
    %48 = arith.truncf %47 : vector<8x32xf32> to vector<8x32xbf16>
    %cst_22 = arith.constant dense<0.000000e+00> : vector<8x128xf32>
    %49 = tpu.matmul %48, %2, %cst_22 {dimension_numbers = #tpu.dot_dimension_numbers<[1], [0], [0], [1], [0, 0, 1, 1], [], []>} : vector<8x32xbf16>, vector<32x128xbf16>, vector<8x128xf32> -> vector<8x128xf32>
    %50 = vector.broadcast %7 : vector<1x128xf32> to vector<8x128xf32>
    %51 = arith.addf %49, %50 : vector<8x128xf32>
    %52 = arith.truncf %18 : vector<8x32xf32> to vector<8x32xbf16>
    %cst_23 = arith.constant dense<0.000000e+00> : vector<8x128xf32>
    %53 = tpu.matmul %52, %3, %cst_23 {dimension_numbers = #tpu.dot_dimension_numbers<[1], [0], [0], [1], [0, 0, 1, 1], [], []>} : vector<8x32xbf16>, vector<32x128xbf16>, vector<8x128xf32> -> vector<8x128xf32>
    %54 = vector.broadcast %8 : vector<1x128xf32> to vector<8x128xf32>
    %55 = arith.addf %53, %54 : vector<8x128xf32>
    %56 = vector.extract_strided_slice %51 {offsets = [0, 0], sizes = [8, 32], strides = [1, 1]} : vector<8x128xf32> to vector<8x32xf32>
    %57 = vector.extract_strided_slice %55 {offsets = [0, 0], sizes = [8, 32], strides = [1, 1]} : vector<8x128xf32> to vector<8x32xf32>
    %58 = arith.addf %56, %57 : vector<8x32xf32>
    %59 = arith.negf %58 : vector<8x32xf32>
    %60 = math.exp %59 : vector<8x32xf32>
    %cst_24 = arith.constant 1.000000e+00 : f32
    %61 = vector.broadcast %cst_24 : f32 to vector<8x32xf32>
    %62 = arith.addf %61, %60 : vector<8x32xf32>
    %63 = arith.divf %61, %62 : vector<8x32xf32>
    %64 = vector.extract_strided_slice %51 {offsets = [0, 32], sizes = [8, 32], strides = [1, 1]} : vector<8x128xf32> to vector<8x32xf32>
    %65 = vector.extract_strided_slice %55 {offsets = [0, 32], sizes = [8, 32], strides = [1, 1]} : vector<8x128xf32> to vector<8x32xf32>
    %66 = arith.addf %64, %65 : vector<8x32xf32>
    %67 = arith.negf %66 : vector<8x32xf32>
    %68 = math.exp %67 : vector<8x32xf32>
    %cst_25 = arith.constant 1.000000e+00 : f32
    %69 = vector.broadcast %cst_25 : f32 to vector<8x32xf32>
    %70 = arith.addf %69, %68 : vector<8x32xf32>
    %71 = arith.divf %69, %70 : vector<8x32xf32>
    %72 = vector.extract_strided_slice %51 {offsets = [0, 64], sizes = [8, 32], strides = [1, 1]} : vector<8x128xf32> to vector<8x32xf32>
    %73 = vector.extract_strided_slice %55 {offsets = [0, 64], sizes = [8, 32], strides = [1, 1]} : vector<8x128xf32> to vector<8x32xf32>
    %74 = arith.mulf %63, %73 : vector<8x32xf32>
    %75 = arith.addf %72, %74 : vector<8x32xf32>
    %76 = math.tanh %75 : vector<8x32xf32>
    %77 = arith.subf %18, %76 : vector<8x32xf32>
    %78 = arith.mulf %71, %77 : vector<8x32xf32>
    %79 = arith.addf %76, %78 : vector<8x32xf32>
    %c0_26 = arith.constant 0 : index
    %c0_27 = arith.constant 0 : index
    %80 = vector.load %arg6[%c0_26, %c0_27] : memref<64x32xf32, #tpu.memory_space<vmem>>, vector<8x32xf32>
    tpu.vector_store %arg6[%c0_26, %c0_27], %79 {strides = array<i32>} : memref<64x32xf32, #tpu.memory_space<vmem>>, vector<8x32xf32>,
    %81 = arith.truncf %47 : vector<8x32xf32> to vector<8x32xbf16>
    %cst_28 = arith.constant dense<0.000000e+00> : vector<8x128xf32>
    %82 = tpu.matmul %81, %1, %cst_28 {dimension_numbers = #tpu.dot_dimension_numbers<[1], [0], [0], [1], [0, 0, 1, 1], [], []>} : vector<8x32xbf16>, vector<32x128xbf16>, vector<8x128xf32> -> vector<8x128xf32>
    %83 = vector.broadcast %6 : vector<1x128xf32> to vector<8x128xf32>
    %84 = arith.addf %82, %83 : vector<8x128xf32>
    %85 = vector.extract_strided_slice %14 {offsets = [8, 0], sizes = [8, 128], strides = [1, 1]} : vector<64x128xf32> to vector<8x128xf32>
    %86 = vector.extract_strided_slice %85 {offsets = [0, 0], sizes = [8, 32], strides = [1, 1]} : vector<8x128xf32> to vector<8x32xf32>
    %87 = vector.extract_strided_slice %84 {offsets = [0, 0], sizes = [8, 32], strides = [1, 1]} : vector<8x128xf32> to vector<8x32xf32>
    %88 = arith.addf %86, %87 : vector<8x32xf32>
    %89 = arith.negf %88 : vector<8x32xf32>
    %90 = math.exp %89 : vector<8x32xf32>
    %cst_29 = arith.constant 1.000000e+00 : f32
    %91 = vector.broadcast %cst_29 : f32 to vector<8x32xf32>
    %92 = arith.addf %91, %90 : vector<8x32xf32>
    %93 = arith.divf %91, %92 : vector<8x32xf32>
    %94 = vector.extract_strided_slice %85 {offsets = [0, 32], sizes = [8, 32], strides = [1, 1]} : vector<8x128xf32> to vector<8x32xf32>
    %95 = vector.extract_strided_slice %84 {offsets = [0, 32], sizes = [8, 32], strides = [1, 1]} : vector<8x128xf32> to vector<8x32xf32>
    %96 = arith.addf %94, %95 : vector<8x32xf32>
    %97 = arith.negf %96 : vector<8x32xf32>
    %98 = math.exp %97 : vector<8x32xf32>
    %cst_30 = arith.constant 1.000000e+00 : f32
    %99 = vector.broadcast %cst_30 : f32 to vector<8x32xf32>
    %100 = arith.addf %99, %98 : vector<8x32xf32>
    %101 = arith.divf %99, %100 : vector<8x32xf32>
    %102 = vector.extract_strided_slice %85 {offsets = [0, 64], sizes = [8, 32], strides = [1, 1]} : vector<8x128xf32> to vector<8x32xf32>
    %103 = vector.extract_strided_slice %84 {offsets = [0, 64], sizes = [8, 32], strides = [1, 1]} : vector<8x128xf32> to vector<8x32xf32>
    %104 = arith.mulf %93, %103 : vector<8x32xf32>
    %105 = arith.addf %102, %104 : vector<8x32xf32>
    %106 = math.tanh %105 : vector<8x32xf32>
    %107 = arith.subf %47, %106 : vector<8x32xf32>
    %108 = arith.mulf %101, %107 : vector<8x32xf32>
    %109 = arith.addf %106, %108 : vector<8x32xf32>
    %110 = arith.truncf %109 : vector<8x32xf32> to vector<8x32xbf16>
    %cst_31 = arith.constant dense<0.000000e+00> : vector<8x128xf32>
    %111 = tpu.matmul %110, %2, %cst_31 {dimension_numbers = #tpu.dot_dimension_numbers<[1], [0], [0], [1], [0, 0, 1, 1], [], []>} : vector<8x32xbf16>, vector<32x128xbf16>, vector<8x128xf32> -> vector<8x128xf32>
    %112 = vector.broadcast %7 : vector<1x128xf32> to vector<8x128xf32>
    %113 = arith.addf %111, %112 : vector<8x128xf32>
    %114 = arith.truncf %79 : vector<8x32xf32> to vector<8x32xbf16>
    %cst_32 = arith.constant dense<0.000000e+00> : vector<8x128xf32>
    %115 = tpu.matmul %114, %3, %cst_32 {dimension_numbers = #tpu.dot_dimension_numbers<[1], [0], [0], [1], [0, 0, 1, 1], [], []>} : vector<8x32xbf16>, vector<32x128xbf16>, vector<8x128xf32> -> vector<8x128xf32>
    %116 = vector.broadcast %8 : vector<1x128xf32> to vector<8x128xf32>
    %117 = arith.addf %115, %116 : vector<8x128xf32>
    %118 = vector.extract_strided_slice %113 {offsets = [0, 0], sizes = [8, 32], strides = [1, 1]} : vector<8x128xf32> to vector<8x32xf32>
    %119 = vector.extract_strided_slice %117 {offsets = [0, 0], sizes = [8, 32], strides = [1, 1]} : vector<8x128xf32> to vector<8x32xf32>
    %120 = arith.addf %118, %119 : vector<8x32xf32>
    %121 = arith.negf %120 : vector<8x32xf32>
    %122 = math.exp %121 : vector<8x32xf32>
    %cst_33 = arith.constant 1.000000e+00 : f32
    %123 = vector.broadcast %cst_33 : f32 to vector<8x32xf32>
    %124 = arith.addf %123, %122 : vector<8x32xf32>
    %125 = arith.divf %123, %124 : vector<8x32xf32>
    %126 = vector.extract_strided_slice %113 {offsets = [0, 32], sizes = [8, 32], strides = [1, 1]} : vector<8x128xf32> to vector<8x32xf32>
    %127 = vector.extract_strided_slice %117 {offsets = [0, 32], sizes = [8, 32], strides = [1, 1]} : vector<8x128xf32> to vector<8x32xf32>
    %128 = arith.addf %126, %127 : vector<8x32xf32>
    %129 = arith.negf %128 : vector<8x32xf32>
    %130 = math.exp %129 : vector<8x32xf32>
    %cst_34 = arith.constant 1.000000e+00 : f32
    %131 = vector.broadcast %cst_34 : f32 to vector<8x32xf32>
    %132 = arith.addf %131, %130 : vector<8x32xf32>
    %133 = arith.divf %131, %132 : vector<8x32xf32>
    %134 = vector.extract_strided_slice %113 {offsets = [0, 64], sizes = [8, 32], strides = [1, 1]} : vector<8x128xf32> to vector<8x32xf32>
    %135 = vector.extract_strided_slice %117 {offsets = [0, 64], sizes = [8, 32], strides = [1, 1]} : vector<8x128xf32> to vector<8x32xf32>
    %136 = arith.mulf %125, %135 : vector<8x32xf32>
    %137 = arith.addf %134, %136 : vector<8x32xf32>
    %138 = math.tanh %137 : vector<8x32xf32>
    %139 = arith.subf %79, %138 : vector<8x32xf32>
    %140 = arith.mulf %133, %139 : vector<8x32xf32>
    %141 = arith.addf %138, %140 : vector<8x32xf32>
    %c8 = arith.constant 8 : index
    %c0_35 = arith.constant 0 : index
    %142 = vector.load %arg6[%c8, %c0_35] : memref<64x32xf32, #tpu.memory_space<vmem>>, vector<8x32xf32>
    tpu.vector_store %arg6[%c8, %c0_35], %141 {strides = array<i32>} : memref<64x32xf32, #tpu.memory_space<vmem>>, vector<8x32xf32>,
    %143 = arith.truncf %109 : vector<8x32xf32> to vector<8x32xbf16>
    %cst_36 = arith.constant dense<0.000000e+00> : vector<8x128xf32>
    %144 = tpu.matmul %143, %1, %cst_36 {dimension_numbers = #tpu.dot_dimension_numbers<[1], [0], [0], [1], [0, 0, 1, 1], [], []>} : vector<8x32xbf16>, vector<32x128xbf16>, vector<8x128xf32> -> vector<8x128xf32>
    %145 = vector.broadcast %6 : vector<1x128xf32> to vector<8x128xf32>
    %146 = arith.addf %144, %145 : vector<8x128xf32>
    %147 = vector.extract_strided_slice %14 {offsets = [16, 0], sizes = [8, 128], strides = [1, 1]} : vector<64x128xf32> to vector<8x128xf32>
    %148 = vector.extract_strided_slice %147 {offsets = [0, 0], sizes = [8, 32], strides = [1, 1]} : vector<8x128xf32> to vector<8x32xf32>
    %149 = vector.extract_strided_slice %146 {offsets = [0, 0], sizes = [8, 32], strides = [1, 1]} : vector<8x128xf32> to vector<8x32xf32>
    %150 = arith.addf %148, %149 : vector<8x32xf32>
    %151 = arith.negf %150 : vector<8x32xf32>
    %152 = math.exp %151 : vector<8x32xf32>
    %cst_37 = arith.constant 1.000000e+00 : f32
    %153 = vector.broadcast %cst_37 : f32 to vector<8x32xf32>
    %154 = arith.addf %153, %152 : vector<8x32xf32>
    %155 = arith.divf %153, %154 : vector<8x32xf32>
    %156 = vector.extract_strided_slice %147 {offsets = [0, 32], sizes = [8, 32], strides = [1, 1]} : vector<8x128xf32> to vector<8x32xf32>
    %157 = vector.extract_strided_slice %146 {offsets = [0, 32], sizes = [8, 32], strides = [1, 1]} : vector<8x128xf32> to vector<8x32xf32>
    %158 = arith.addf %156, %157 : vector<8x32xf32>
    %159 = arith.negf %158 : vector<8x32xf32>
    %160 = math.exp %159 : vector<8x32xf32>
    %cst_38 = arith.constant 1.000000e+00 : f32
    %161 = vector.broadcast %cst_38 : f32 to vector<8x32xf32>
    %162 = arith.addf %161, %160 : vector<8x32xf32>
    %163 = arith.divf %161, %162 : vector<8x32xf32>
    %164 = vector.extract_strided_slice %147 {offsets = [0, 64], sizes = [8, 32], strides = [1, 1]} : vector<8x128xf32> to vector<8x32xf32>
    %165 = vector.extract_strided_slice %146 {offsets = [0, 64], sizes = [8, 32], strides = [1, 1]} : vector<8x128xf32> to vector<8x32xf32>
    %166 = arith.mulf %155, %165 : vector<8x32xf32>
    %167 = arith.addf %164, %166 : vector<8x32xf32>
    %168 = math.tanh %167 : vector<8x32xf32>
    %169 = arith.subf %109, %168 : vector<8x32xf32>
    %170 = arith.mulf %163, %169 : vector<8x32xf32>
    %171 = arith.addf %168, %170 : vector<8x32xf32>
    %172 = arith.truncf %171 : vector<8x32xf32> to vector<8x32xbf16>
    %cst_39 = arith.constant dense<0.000000e+00> : vector<8x128xf32>
    %173 = tpu.matmul %172, %2, %cst_39 {dimension_numbers = #tpu.dot_dimension_numbers<[1], [0], [0], [1], [0, 0, 1, 1], [], []>} : vector<8x32xbf16>, vector<32x128xbf16>, vector<8x128xf32> -> vector<8x128xf32>
    %174 = vector.broadcast %7 : vector<1x128xf32> to vector<8x128xf32>
    %175 = arith.addf %173, %174 : vector<8x128xf32>
    %176 = arith.truncf %141 : vector<8x32xf32> to vector<8x32xbf16>
    %cst_40 = arith.constant dense<0.000000e+00> : vector<8x128xf32>
    %177 = tpu.matmul %176, %3, %cst_40 {dimension_numbers = #tpu.dot_dimension_numbers<[1], [0], [0], [1], [0, 0, 1, 1], [], []>} : vector<8x32xbf16>, vector<32x128xbf16>, vector<8x128xf32> -> vector<8x128xf32>
    %178 = vector.broadcast %8 : vector<1x128xf32> to vector<8x128xf32>
    %179 = arith.addf %177, %178 : vector<8x128xf32>
    %180 = vector.extract_strided_slice %175 {offsets = [0, 0], sizes = [8, 32], strides = [1, 1]} : vector<8x128xf32> to vector<8x32xf32>
    %181 = vector.extract_strided_slice %179 {offsets = [0, 0], sizes = [8, 32], strides = [1, 1]} : vector<8x128xf32> to vector<8x32xf32>
    %182 = arith.addf %180, %181 : vector<8x32xf32>
    %183 = arith.negf %182 : vector<8x32xf32>
    %184 = math.exp %183 : vector<8x32xf32>
    %cst_41 = arith.constant 1.000000e+00 : f32
    %185 = vector.broadcast %cst_41 : f32 to vector<8x32xf32>
    %186 = arith.addf %185, %184 : vector<8x32xf32>
    %187 = arith.divf %185, %186 : vector<8x32xf32>
    %188 = vector.extract_strided_slice %175 {offsets = [0, 32], sizes = [8, 32], strides = [1, 1]} : vector<8x128xf32> to vector<8x32xf32>
    %189 = vector.extract_strided_slice %179 {offsets = [0, 32], sizes = [8, 32], strides = [1, 1]} : vector<8x128xf32> to vector<8x32xf32>
    %190 = arith.addf %188, %189 : vector<8x32xf32>
    %191 = arith.negf %190 : vector<8x32xf32>
    %192 = math.exp %191 : vector<8x32xf32>
    %cst_42 = arith.constant 1.000000e+00 : f32
    %193 = vector.broadcast %cst_42 : f32 to vector<8x32xf32>
    %194 = arith.addf %193, %192 : vector<8x32xf32>
    %195 = arith.divf %193, %194 : vector<8x32xf32>
    %196 = vector.extract_strided_slice %175 {offsets = [0, 64], sizes = [8, 32], strides = [1, 1]} : vector<8x128xf32> to vector<8x32xf32>
    %197 = vector.extract_strided_slice %179 {offsets = [0, 64], sizes = [8, 32], strides = [1, 1]} : vector<8x128xf32> to vector<8x32xf32>
    %198 = arith.mulf %187, %197 : vector<8x32xf32>
    %199 = arith.addf %196, %198 : vector<8x32xf32>
    %200 = math.tanh %199 : vector<8x32xf32>
    %201 = arith.subf %141, %200 : vector<8x32xf32>
    %202 = arith.mulf %195, %201 : vector<8x32xf32>
    %203 = arith.addf %200, %202 : vector<8x32xf32>
    %c16_43 = arith.constant 16 : index
    %c0_44 = arith.constant 0 : index
    %204 = vector.load %arg6[%c16_43, %c0_44] : memref<64x32xf32, #tpu.memory_space<vmem>>, vector<8x32xf32>
    tpu.vector_store %arg6[%c16_43, %c0_44], %203 {strides = array<i32>} : memref<64x32xf32, #tpu.memory_space<vmem>>, vector<8x32xf32>,
    %205 = arith.truncf %171 : vector<8x32xf32> to vector<8x32xbf16>
    %cst_45 = arith.constant dense<0.000000e+00> : vector<8x128xf32>
    %206 = tpu.matmul %205, %1, %cst_45 {dimension_numbers = #tpu.dot_dimension_numbers<[1], [0], [0], [1], [0, 0, 1, 1], [], []>} : vector<8x32xbf16>, vector<32x128xbf16>, vector<8x128xf32> -> vector<8x128xf32>
    %207 = vector.broadcast %6 : vector<1x128xf32> to vector<8x128xf32>
    %208 = arith.addf %206, %207 : vector<8x128xf32>
    %209 = vector.extract_strided_slice %14 {offsets = [24, 0], sizes = [8, 128], strides = [1, 1]} : vector<64x128xf32> to vector<8x128xf32>
    %210 = vector.extract_strided_slice %209 {offsets = [0, 0], sizes = [8, 32], strides = [1, 1]} : vector<8x128xf32> to vector<8x32xf32>
    %211 = vector.extract_strided_slice %208 {offsets = [0, 0], sizes = [8, 32], strides = [1, 1]} : vector<8x128xf32> to vector<8x32xf32>
    %212 = arith.addf %210, %211 : vector<8x32xf32>
    %213 = arith.negf %212 : vector<8x32xf32>
    %214 = math.exp %213 : vector<8x32xf32>
    %cst_46 = arith.constant 1.000000e+00 : f32
    %215 = vector.broadcast %cst_46 : f32 to vector<8x32xf32>
    %216 = arith.addf %215, %214 : vector<8x32xf32>
    %217 = arith.divf %215, %216 : vector<8x32xf32>
    %218 = vector.extract_strided_slice %209 {offsets = [0, 32], sizes = [8, 32], strides = [1, 1]} : vector<8x128xf32> to vector<8x32xf32>
    %219 = vector.extract_strided_slice %208 {offsets = [0, 32], sizes = [8, 32], strides = [1, 1]} : vector<8x128xf32> to vector<8x32xf32>
    %220 = arith.addf %218, %219 : vector<8x32xf32>
    %221 = arith.negf %220 : vector<8x32xf32>
    %222 = math.exp %221 : vector<8x32xf32>
    %cst_47 = arith.constant 1.000000e+00 : f32
    %223 = vector.broadcast %cst_47 : f32 to vector<8x32xf32>
    %224 = arith.addf %223, %222 : vector<8x32xf32>
    %225 = arith.divf %223, %224 : vector<8x32xf32>
    %226 = vector.extract_strided_slice %209 {offsets = [0, 64], sizes = [8, 32], strides = [1, 1]} : vector<8x128xf32> to vector<8x32xf32>
    %227 = vector.extract_strided_slice %208 {offsets = [0, 64], sizes = [8, 32], strides = [1, 1]} : vector<8x128xf32> to vector<8x32xf32>
    %228 = arith.mulf %217, %227 : vector<8x32xf32>
    %229 = arith.addf %226, %228 : vector<8x32xf32>
    %230 = math.tanh %229 : vector<8x32xf32>
    %231 = arith.subf %171, %230 : vector<8x32xf32>
    %232 = arith.mulf %225, %231 : vector<8x32xf32>
    %233 = arith.addf %230, %232 : vector<8x32xf32>
    %234 = arith.truncf %233 : vector<8x32xf32> to vector<8x32xbf16>
    %cst_48 = arith.constant dense<0.000000e+00> : vector<8x128xf32>
    %235 = tpu.matmul %234, %2, %cst_48 {dimension_numbers = #tpu.dot_dimension_numbers<[1], [0], [0], [1], [0, 0, 1, 1], [], []>} : vector<8x32xbf16>, vector<32x128xbf16>, vector<8x128xf32> -> vector<8x128xf32>
    %236 = vector.broadcast %7 : vector<1x128xf32> to vector<8x128xf32>
    %237 = arith.addf %235, %236 : vector<8x128xf32>
    %238 = arith.truncf %203 : vector<8x32xf32> to vector<8x32xbf16>
    %cst_49 = arith.constant dense<0.000000e+00> : vector<8x128xf32>
    %239 = tpu.matmul %238, %3, %cst_49 {dimension_numbers = #tpu.dot_dimension_numbers<[1], [0], [0], [1], [0, 0, 1, 1], [], []>} : vector<8x32xbf16>, vector<32x128xbf16>, vector<8x128xf32> -> vector<8x128xf32>
    %240 = vector.broadcast %8 : vector<1x128xf32> to vector<8x128xf32>
    %241 = arith.addf %239, %240 : vector<8x128xf32>
    %242 = vector.extract_strided_slice %237 {offsets = [0, 0], sizes = [8, 32], strides = [1, 1]} : vector<8x128xf32> to vector<8x32xf32>
    %243 = vector.extract_strided_slice %241 {offsets = [0, 0], sizes = [8, 32], strides = [1, 1]} : vector<8x128xf32> to vector<8x32xf32>
    %244 = arith.addf %242, %243 : vector<8x32xf32>
    %245 = arith.negf %244 : vector<8x32xf32>
    %246 = math.exp %245 : vector<8x32xf32>
    %cst_50 = arith.constant 1.000000e+00 : f32
    %247 = vector.broadcast %cst_50 : f32 to vector<8x32xf32>
    %248 = arith.addf %247, %246 : vector<8x32xf32>
    %249 = arith.divf %247, %248 : vector<8x32xf32>
    %250 = vector.extract_strided_slice %237 {offsets = [0, 32], sizes = [8, 32], strides = [1, 1]} : vector<8x128xf32> to vector<8x32xf32>
    %251 = vector.extract_strided_slice %241 {offsets = [0, 32], sizes = [8, 32], strides = [1, 1]} : vector<8x128xf32> to vector<8x32xf32>
    %252 = arith.addf %250, %251 : vector<8x32xf32>
    %253 = arith.negf %252 : vector<8x32xf32>
    %254 = math.exp %253 : vector<8x32xf32>
    %cst_51 = arith.constant 1.000000e+00 : f32
    %255 = vector.broadcast %cst_51 : f32 to vector<8x32xf32>
    %256 = arith.addf %255, %254 : vector<8x32xf32>
    %257 = arith.divf %255, %256 : vector<8x32xf32>
    %258 = vector.extract_strided_slice %237 {offsets = [0, 64], sizes = [8, 32], strides = [1, 1]} : vector<8x128xf32> to vector<8x32xf32>
    %259 = vector.extract_strided_slice %241 {offsets = [0, 64], sizes = [8, 32], strides = [1, 1]} : vector<8x128xf32> to vector<8x32xf32>
    %260 = arith.mulf %249, %259 : vector<8x32xf32>
    %261 = arith.addf %258, %260 : vector<8x32xf32>
    %262 = math.tanh %261 : vector<8x32xf32>
    %263 = arith.subf %203, %262 : vector<8x32xf32>
    %264 = arith.mulf %257, %263 : vector<8x32xf32>
    %265 = arith.addf %262, %264 : vector<8x32xf32>
    %c24 = arith.constant 24 : index
    %c0_52 = arith.constant 0 : index
    %266 = vector.load %arg6[%c24, %c0_52] : memref<64x32xf32, #tpu.memory_space<vmem>>, vector<8x32xf32>
    tpu.vector_store %arg6[%c24, %c0_52], %265 {strides = array<i32>} : memref<64x32xf32, #tpu.memory_space<vmem>>, vector<8x32xf32>,
    %267 = arith.truncf %233 : vector<8x32xf32> to vector<8x32xbf16>
    %cst_53 = arith.constant dense<0.000000e+00> : vector<8x128xf32>
    %268 = tpu.matmul %267, %1, %cst_53 {dimension_numbers = #tpu.dot_dimension_numbers<[1], [0], [0], [1], [0, 0, 1, 1], [], []>} : vector<8x32xbf16>, vector<32x128xbf16>, vector<8x128xf32> -> vector<8x128xf32>
    %269 = vector.broadcast %6 : vector<1x128xf32> to vector<8x128xf32>
    %270 = arith.addf %268, %269 : vector<8x128xf32>
    %271 = vector.extract_strided_slice %14 {offsets = [32, 0], sizes = [8, 128], strides = [1, 1]} : vector<64x128xf32> to vector<8x128xf32>
    %272 = vector.extract_strided_slice %271 {offsets = [0, 0], sizes = [8, 32], strides = [1, 1]} : vector<8x128xf32> to vector<8x32xf32>
    %273 = vector.extract_strided_slice %270 {offsets = [0, 0], sizes = [8, 32], strides = [1, 1]} : vector<8x128xf32> to vector<8x32xf32>
    %274 = arith.addf %272, %273 : vector<8x32xf32>
    %275 = arith.negf %274 : vector<8x32xf32>
    %276 = math.exp %275 : vector<8x32xf32>
    %cst_54 = arith.constant 1.000000e+00 : f32
    %277 = vector.broadcast %cst_54 : f32 to vector<8x32xf32>
    %278 = arith.addf %277, %276 : vector<8x32xf32>
    %279 = arith.divf %277, %278 : vector<8x32xf32>
    %280 = vector.extract_strided_slice %271 {offsets = [0, 32], sizes = [8, 32], strides = [1, 1]} : vector<8x128xf32> to vector<8x32xf32>
    %281 = vector.extract_strided_slice %270 {offsets = [0, 32], sizes = [8, 32], strides = [1, 1]} : vector<8x128xf32> to vector<8x32xf32>
    %282 = arith.addf %280, %281 : vector<8x32xf32>
    %283 = arith.negf %282 : vector<8x32xf32>
    %284 = math.exp %283 : vector<8x32xf32>
    %cst_55 = arith.constant 1.000000e+00 : f32
    %285 = vector.broadcast %cst_55 : f32 to vector<8x32xf32>
    %286 = arith.addf %285, %284 : vector<8x32xf32>
    %287 = arith.divf %285, %286 : vector<8x32xf32>
    %288 = vector.extract_strided_slice %271 {offsets = [0, 64], sizes = [8, 32], strides = [1, 1]} : vector<8x128xf32> to vector<8x32xf32>
    %289 = vector.extract_strided_slice %270 {offsets = [0, 64], sizes = [8, 32], strides = [1, 1]} : vector<8x128xf32> to vector<8x32xf32>
    %290 = arith.mulf %279, %289 : vector<8x32xf32>
    %291 = arith.addf %288, %290 : vector<8x32xf32>
    %292 = math.tanh %291 : vector<8x32xf32>
    %293 = arith.subf %233, %292 : vector<8x32xf32>
    %294 = arith.mulf %287, %293 : vector<8x32xf32>
    %295 = arith.addf %292, %294 : vector<8x32xf32>
    %296 = arith.truncf %295 : vector<8x32xf32> to vector<8x32xbf16>
    %cst_56 = arith.constant dense<0.000000e+00> : vector<8x128xf32>
    %297 = tpu.matmul %296, %2, %cst_56 {dimension_numbers = #tpu.dot_dimension_numbers<[1], [0], [0], [1], [0, 0, 1, 1], [], []>} : vector<8x32xbf16>, vector<32x128xbf16>, vector<8x128xf32> -> vector<8x128xf32>
    %298 = vector.broadcast %7 : vector<1x128xf32> to vector<8x128xf32>
    %299 = arith.addf %297, %298 : vector<8x128xf32>
    %300 = arith.truncf %265 : vector<8x32xf32> to vector<8x32xbf16>
    %cst_57 = arith.constant dense<0.000000e+00> : vector<8x128xf32>
    %301 = tpu.matmul %300, %3, %cst_57 {dimension_numbers = #tpu.dot_dimension_numbers<[1], [0], [0], [1], [0, 0, 1, 1], [], []>} : vector<8x32xbf16>, vector<32x128xbf16>, vector<8x128xf32> -> vector<8x128xf32>
    %302 = vector.broadcast %8 : vector<1x128xf32> to vector<8x128xf32>
    %303 = arith.addf %301, %302 : vector<8x128xf32>
    %304 = vector.extract_strided_slice %299 {offsets = [0, 0], sizes = [8, 32], strides = [1, 1]} : vector<8x128xf32> to vector<8x32xf32>
    %305 = vector.extract_strided_slice %303 {offsets = [0, 0], sizes = [8, 32], strides = [1, 1]} : vector<8x128xf32> to vector<8x32xf32>
    %306 = arith.addf %304, %305 : vector<8x32xf32>
    %307 = arith.negf %306 : vector<8x32xf32>
    %308 = math.exp %307 : vector<8x32xf32>
    %cst_58 = arith.constant 1.000000e+00 : f32
    %309 = vector.broadcast %cst_58 : f32 to vector<8x32xf32>
    %310 = arith.addf %309, %308 : vector<8x32xf32>
    %311 = arith.divf %309, %310 : vector<8x32xf32>
    %312 = vector.extract_strided_slice %299 {offsets = [0, 32], sizes = [8, 32], strides = [1, 1]} : vector<8x128xf32> to vector<8x32xf32>
    %313 = vector.extract_strided_slice %303 {offsets = [0, 32], sizes = [8, 32], strides = [1, 1]} : vector<8x128xf32> to vector<8x32xf32>
    %314 = arith.addf %312, %313 : vector<8x32xf32>
    %315 = arith.negf %314 : vector<8x32xf32>
    %316 = math.exp %315 : vector<8x32xf32>
    %cst_59 = arith.constant 1.000000e+00 : f32
    %317 = vector.broadcast %cst_59 : f32 to vector<8x32xf32>
    %318 = arith.addf %317, %316 : vector<8x32xf32>
    %319 = arith.divf %317, %318 : vector<8x32xf32>
    %320 = vector.extract_strided_slice %299 {offsets = [0, 64], sizes = [8, 32], strides = [1, 1]} : vector<8x128xf32> to vector<8x32xf32>
    %321 = vector.extract_strided_slice %303 {offsets = [0, 64], sizes = [8, 32], strides = [1, 1]} : vector<8x128xf32> to vector<8x32xf32>
    %322 = arith.mulf %311, %321 : vector<8x32xf32>
    %323 = arith.addf %320, %322 : vector<8x32xf32>
    %324 = math.tanh %323 : vector<8x32xf32>
    %325 = arith.subf %265, %324 : vector<8x32xf32>
    %326 = arith.mulf %319, %325 : vector<8x32xf32>
    %327 = arith.addf %324, %326 : vector<8x32xf32>
    %c32 = arith.constant 32 : index
    %c0_60 = arith.constant 0 : index
    %328 = vector.load %arg6[%c32, %c0_60] : memref<64x32xf32, #tpu.memory_space<vmem>>, vector<8x32xf32>
    tpu.vector_store %arg6[%c32, %c0_60], %327 {strides = array<i32>} : memref<64x32xf32, #tpu.memory_space<vmem>>, vector<8x32xf32>,
    %329 = arith.truncf %295 : vector<8x32xf32> to vector<8x32xbf16>
    %cst_61 = arith.constant dense<0.000000e+00> : vector<8x128xf32>
    %330 = tpu.matmul %329, %1, %cst_61 {dimension_numbers = #tpu.dot_dimension_numbers<[1], [0], [0], [1], [0, 0, 1, 1], [], []>} : vector<8x32xbf16>, vector<32x128xbf16>, vector<8x128xf32> -> vector<8x128xf32>
    %331 = vector.broadcast %6 : vector<1x128xf32> to vector<8x128xf32>
    %332 = arith.addf %330, %331 : vector<8x128xf32>
    %333 = vector.extract_strided_slice %14 {offsets = [40, 0], sizes = [8, 128], strides = [1, 1]} : vector<64x128xf32> to vector<8x128xf32>
    %334 = vector.extract_strided_slice %333 {offsets = [0, 0], sizes = [8, 32], strides = [1, 1]} : vector<8x128xf32> to vector<8x32xf32>
    %335 = vector.extract_strided_slice %332 {offsets = [0, 0], sizes = [8, 32], strides = [1, 1]} : vector<8x128xf32> to vector<8x32xf32>
    %336 = arith.addf %334, %335 : vector<8x32xf32>
    %337 = arith.negf %336 : vector<8x32xf32>
    %338 = math.exp %337 : vector<8x32xf32>
    %cst_62 = arith.constant 1.000000e+00 : f32
    %339 = vector.broadcast %cst_62 : f32 to vector<8x32xf32>
    %340 = arith.addf %339, %338 : vector<8x32xf32>
    %341 = arith.divf %339, %340 : vector<8x32xf32>
    %342 = vector.extract_strided_slice %333 {offsets = [0, 32], sizes = [8, 32], strides = [1, 1]} : vector<8x128xf32> to vector<8x32xf32>
    %343 = vector.extract_strided_slice %332 {offsets = [0, 32], sizes = [8, 32], strides = [1, 1]} : vector<8x128xf32> to vector<8x32xf32>
    %344 = arith.addf %342, %343 : vector<8x32xf32>
    %345 = arith.negf %344 : vector<8x32xf32>
    %346 = math.exp %345 : vector<8x32xf32>
    %cst_63 = arith.constant 1.000000e+00 : f32
    %347 = vector.broadcast %cst_63 : f32 to vector<8x32xf32>
    %348 = arith.addf %347, %346 : vector<8x32xf32>
    %349 = arith.divf %347, %348 : vector<8x32xf32>
    %350 = vector.extract_strided_slice %333 {offsets = [0, 64], sizes = [8, 32], strides = [1, 1]} : vector<8x128xf32> to vector<8x32xf32>
    %351 = vector.extract_strided_slice %332 {offsets = [0, 64], sizes = [8, 32], strides = [1, 1]} : vector<8x128xf32> to vector<8x32xf32>
    %352 = arith.mulf %341, %351 : vector<8x32xf32>
    %353 = arith.addf %350, %352 : vector<8x32xf32>
    %354 = math.tanh %353 : vector<8x32xf32>
    %355 = arith.subf %295, %354 : vector<8x32xf32>
    %356 = arith.mulf %349, %355 : vector<8x32xf32>
    %357 = arith.addf %354, %356 : vector<8x32xf32>
    %358 = arith.truncf %357 : vector<8x32xf32> to vector<8x32xbf16>
    %cst_64 = arith.constant dense<0.000000e+00> : vector<8x128xf32>
    %359 = tpu.matmul %358, %2, %cst_64 {dimension_numbers = #tpu.dot_dimension_numbers<[1], [0], [0], [1], [0, 0, 1, 1], [], []>} : vector<8x32xbf16>, vector<32x128xbf16>, vector<8x128xf32> -> vector<8x128xf32>
    %360 = vector.broadcast %7 : vector<1x128xf32> to vector<8x128xf32>
    %361 = arith.addf %359, %360 : vector<8x128xf32>
    %362 = arith.truncf %327 : vector<8x32xf32> to vector<8x32xbf16>
    %cst_65 = arith.constant dense<0.000000e+00> : vector<8x128xf32>
    %363 = tpu.matmul %362, %3, %cst_65 {dimension_numbers = #tpu.dot_dimension_numbers<[1], [0], [0], [1], [0, 0, 1, 1], [], []>} : vector<8x32xbf16>, vector<32x128xbf16>, vector<8x128xf32> -> vector<8x128xf32>
    %364 = vector.broadcast %8 : vector<1x128xf32> to vector<8x128xf32>
    %365 = arith.addf %363, %364 : vector<8x128xf32>
    %366 = vector.extract_strided_slice %361 {offsets = [0, 0], sizes = [8, 32], strides = [1, 1]} : vector<8x128xf32> to vector<8x32xf32>
    %367 = vector.extract_strided_slice %365 {offsets = [0, 0], sizes = [8, 32], strides = [1, 1]} : vector<8x128xf32> to vector<8x32xf32>
    %368 = arith.addf %366, %367 : vector<8x32xf32>
    %369 = arith.negf %368 : vector<8x32xf32>
    %370 = math.exp %369 : vector<8x32xf32>
    %cst_66 = arith.constant 1.000000e+00 : f32
    %371 = vector.broadcast %cst_66 : f32 to vector<8x32xf32>
    %372 = arith.addf %371, %370 : vector<8x32xf32>
    %373 = arith.divf %371, %372 : vector<8x32xf32>
    %374 = vector.extract_strided_slice %361 {offsets = [0, 32], sizes = [8, 32], strides = [1, 1]} : vector<8x128xf32> to vector<8x32xf32>
    %375 = vector.extract_strided_slice %365 {offsets = [0, 32], sizes = [8, 32], strides = [1, 1]} : vector<8x128xf32> to vector<8x32xf32>
    %376 = arith.addf %374, %375 : vector<8x32xf32>
    %377 = arith.negf %376 : vector<8x32xf32>
    %378 = math.exp %377 : vector<8x32xf32>
    %cst_67 = arith.constant 1.000000e+00 : f32
    %379 = vector.broadcast %cst_67 : f32 to vector<8x32xf32>
    %380 = arith.addf %379, %378 : vector<8x32xf32>
    %381 = arith.divf %379, %380 : vector<8x32xf32>
    %382 = vector.extract_strided_slice %361 {offsets = [0, 64], sizes = [8, 32], strides = [1, 1]} : vector<8x128xf32> to vector<8x32xf32>
    %383 = vector.extract_strided_slice %365 {offsets = [0, 64], sizes = [8, 32], strides = [1, 1]} : vector<8x128xf32> to vector<8x32xf32>
    %384 = arith.mulf %373, %383 : vector<8x32xf32>
    %385 = arith.addf %382, %384 : vector<8x32xf32>
    %386 = math.tanh %385 : vector<8x32xf32>
    %387 = arith.subf %327, %386 : vector<8x32xf32>
    %388 = arith.mulf %381, %387 : vector<8x32xf32>
    %389 = arith.addf %386, %388 : vector<8x32xf32>
    %c40 = arith.constant 40 : index
    %c0_68 = arith.constant 0 : index
    %390 = vector.load %arg6[%c40, %c0_68] : memref<64x32xf32, #tpu.memory_space<vmem>>, vector<8x32xf32>
    tpu.vector_store %arg6[%c40, %c0_68], %389 {strides = array<i32>} : memref<64x32xf32, #tpu.memory_space<vmem>>, vector<8x32xf32>,
    %391 = arith.truncf %357 : vector<8x32xf32> to vector<8x32xbf16>
    %cst_69 = arith.constant dense<0.000000e+00> : vector<8x128xf32>
    %392 = tpu.matmul %391, %1, %cst_69 {dimension_numbers = #tpu.dot_dimension_numbers<[1], [0], [0], [1], [0, 0, 1, 1], [], []>} : vector<8x32xbf16>, vector<32x128xbf16>, vector<8x128xf32> -> vector<8x128xf32>
    %393 = vector.broadcast %6 : vector<1x128xf32> to vector<8x128xf32>
    %394 = arith.addf %392, %393 : vector<8x128xf32>
    %395 = vector.extract_strided_slice %14 {offsets = [48, 0], sizes = [8, 128], strides = [1, 1]} : vector<64x128xf32> to vector<8x128xf32>
    %396 = vector.extract_strided_slice %395 {offsets = [0, 0], sizes = [8, 32], strides = [1, 1]} : vector<8x128xf32> to vector<8x32xf32>
    %397 = vector.extract_strided_slice %394 {offsets = [0, 0], sizes = [8, 32], strides = [1, 1]} : vector<8x128xf32> to vector<8x32xf32>
    %398 = arith.addf %396, %397 : vector<8x32xf32>
    %399 = arith.negf %398 : vector<8x32xf32>
    %400 = math.exp %399 : vector<8x32xf32>
    %cst_70 = arith.constant 1.000000e+00 : f32
    %401 = vector.broadcast %cst_70 : f32 to vector<8x32xf32>
    %402 = arith.addf %401, %400 : vector<8x32xf32>
    %403 = arith.divf %401, %402 : vector<8x32xf32>
    %404 = vector.extract_strided_slice %395 {offsets = [0, 32], sizes = [8, 32], strides = [1, 1]} : vector<8x128xf32> to vector<8x32xf32>
    %405 = vector.extract_strided_slice %394 {offsets = [0, 32], sizes = [8, 32], strides = [1, 1]} : vector<8x128xf32> to vector<8x32xf32>
    %406 = arith.addf %404, %405 : vector<8x32xf32>
    %407 = arith.negf %406 : vector<8x32xf32>
    %408 = math.exp %407 : vector<8x32xf32>
    %cst_71 = arith.constant 1.000000e+00 : f32
    %409 = vector.broadcast %cst_71 : f32 to vector<8x32xf32>
    %410 = arith.addf %409, %408 : vector<8x32xf32>
    %411 = arith.divf %409, %410 : vector<8x32xf32>
    %412 = vector.extract_strided_slice %395 {offsets = [0, 64], sizes = [8, 32], strides = [1, 1]} : vector<8x128xf32> to vector<8x32xf32>
    %413 = vector.extract_strided_slice %394 {offsets = [0, 64], sizes = [8, 32], strides = [1, 1]} : vector<8x128xf32> to vector<8x32xf32>
    %414 = arith.mulf %403, %413 : vector<8x32xf32>
    %415 = arith.addf %412, %414 : vector<8x32xf32>
    %416 = math.tanh %415 : vector<8x32xf32>
    %417 = arith.subf %357, %416 : vector<8x32xf32>
    %418 = arith.mulf %411, %417 : vector<8x32xf32>
    %419 = arith.addf %416, %418 : vector<8x32xf32>
    %420 = arith.truncf %419 : vector<8x32xf32> to vector<8x32xbf16>
    %cst_72 = arith.constant dense<0.000000e+00> : vector<8x128xf32>
    %421 = tpu.matmul %420, %2, %cst_72 {dimension_numbers = #tpu.dot_dimension_numbers<[1], [0], [0], [1], [0, 0, 1, 1], [], []>} : vector<8x32xbf16>, vector<32x128xbf16>, vector<8x128xf32> -> vector<8x128xf32>
    %422 = vector.broadcast %7 : vector<1x128xf32> to vector<8x128xf32>
    %423 = arith.addf %421, %422 : vector<8x128xf32>
    %424 = arith.truncf %389 : vector<8x32xf32> to vector<8x32xbf16>
    %cst_73 = arith.constant dense<0.000000e+00> : vector<8x128xf32>
    %425 = tpu.matmul %424, %3, %cst_73 {dimension_numbers = #tpu.dot_dimension_numbers<[1], [0], [0], [1], [0, 0, 1, 1], [], []>} : vector<8x32xbf16>, vector<32x128xbf16>, vector<8x128xf32> -> vector<8x128xf32>
    %426 = vector.broadcast %8 : vector<1x128xf32> to vector<8x128xf32>
    %427 = arith.addf %425, %426 : vector<8x128xf32>
    %428 = vector.extract_strided_slice %423 {offsets = [0, 0], sizes = [8, 32], strides = [1, 1]} : vector<8x128xf32> to vector<8x32xf32>
    %429 = vector.extract_strided_slice %427 {offsets = [0, 0], sizes = [8, 32], strides = [1, 1]} : vector<8x128xf32> to vector<8x32xf32>
    %430 = arith.addf %428, %429 : vector<8x32xf32>
    %431 = arith.negf %430 : vector<8x32xf32>
    %432 = math.exp %431 : vector<8x32xf32>
    %cst_74 = arith.constant 1.000000e+00 : f32
    %433 = vector.broadcast %cst_74 : f32 to vector<8x32xf32>
    %434 = arith.addf %433, %432 : vector<8x32xf32>
    %435 = arith.divf %433, %434 : vector<8x32xf32>
    %436 = vector.extract_strided_slice %423 {offsets = [0, 32], sizes = [8, 32], strides = [1, 1]} : vector<8x128xf32> to vector<8x32xf32>
    %437 = vector.extract_strided_slice %427 {offsets = [0, 32], sizes = [8, 32], strides = [1, 1]} : vector<8x128xf32> to vector<8x32xf32>
    %438 = arith.addf %436, %437 : vector<8x32xf32>
    %439 = arith.negf %438 : vector<8x32xf32>
    %440 = math.exp %439 : vector<8x32xf32>
    %cst_75 = arith.constant 1.000000e+00 : f32
    %441 = vector.broadcast %cst_75 : f32 to vector<8x32xf32>
    %442 = arith.addf %441, %440 : vector<8x32xf32>
    %443 = arith.divf %441, %442 : vector<8x32xf32>
    %444 = vector.extract_strided_slice %423 {offsets = [0, 64], sizes = [8, 32], strides = [1, 1]} : vector<8x128xf32> to vector<8x32xf32>
    %445 = vector.extract_strided_slice %427 {offsets = [0, 64], sizes = [8, 32], strides = [1, 1]} : vector<8x128xf32> to vector<8x32xf32>
    %446 = arith.mulf %435, %445 : vector<8x32xf32>
    %447 = arith.addf %444, %446 : vector<8x32xf32>
    %448 = math.tanh %447 : vector<8x32xf32>
    %449 = arith.subf %389, %448 : vector<8x32xf32>
    %450 = arith.mulf %443, %449 : vector<8x32xf32>
    %451 = arith.addf %448, %450 : vector<8x32xf32>
    %c48_76 = arith.constant 48 : index
    %c0_77 = arith.constant 0 : index
    %452 = vector.load %arg6[%c48_76, %c0_77] : memref<64x32xf32, #tpu.memory_space<vmem>>, vector<8x32xf32>
    tpu.vector_store %arg6[%c48_76, %c0_77], %451 {strides = array<i32>} : memref<64x32xf32, #tpu.memory_space<vmem>>, vector<8x32xf32>,
    %453 = arith.truncf %419 : vector<8x32xf32> to vector<8x32xbf16>
    %cst_78 = arith.constant dense<0.000000e+00> : vector<8x128xf32>
    %454 = tpu.matmul %453, %1, %cst_78 {dimension_numbers = #tpu.dot_dimension_numbers<[1], [0], [0], [1], [0, 0, 1, 1], [], []>} : vector<8x32xbf16>, vector<32x128xbf16>, vector<8x128xf32> -> vector<8x128xf32>
    %455 = vector.broadcast %6 : vector<1x128xf32> to vector<8x128xf32>
    %456 = arith.addf %454, %455 : vector<8x128xf32>
    %457 = vector.extract_strided_slice %14 {offsets = [56, 0], sizes = [8, 128], strides = [1, 1]} : vector<64x128xf32> to vector<8x128xf32>
    %458 = vector.extract_strided_slice %457 {offsets = [0, 0], sizes = [8, 32], strides = [1, 1]} : vector<8x128xf32> to vector<8x32xf32>
    %459 = vector.extract_strided_slice %456 {offsets = [0, 0], sizes = [8, 32], strides = [1, 1]} : vector<8x128xf32> to vector<8x32xf32>
    %460 = arith.addf %458, %459 : vector<8x32xf32>
    %461 = arith.negf %460 : vector<8x32xf32>
    %462 = math.exp %461 : vector<8x32xf32>
    %cst_79 = arith.constant 1.000000e+00 : f32
    %463 = vector.broadcast %cst_79 : f32 to vector<8x32xf32>
    %464 = arith.addf %463, %462 : vector<8x32xf32>
    %465 = arith.divf %463, %464 : vector<8x32xf32>
    %466 = vector.extract_strided_slice %457 {offsets = [0, 32], sizes = [8, 32], strides = [1, 1]} : vector<8x128xf32> to vector<8x32xf32>
    %467 = vector.extract_strided_slice %456 {offsets = [0, 32], sizes = [8, 32], strides = [1, 1]} : vector<8x128xf32> to vector<8x32xf32>
    %468 = arith.addf %466, %467 : vector<8x32xf32>
    %469 = arith.negf %468 : vector<8x32xf32>
    %470 = math.exp %469 : vector<8x32xf32>
    %cst_80 = arith.constant 1.000000e+00 : f32
    %471 = vector.broadcast %cst_80 : f32 to vector<8x32xf32>
    %472 = arith.addf %471, %470 : vector<8x32xf32>
    %473 = arith.divf %471, %472 : vector<8x32xf32>
    %474 = vector.extract_strided_slice %457 {offsets = [0, 64], sizes = [8, 32], strides = [1, 1]} : vector<8x128xf32> to vector<8x32xf32>
    %475 = vector.extract_strided_slice %456 {offsets = [0, 64], sizes = [8, 32], strides = [1, 1]} : vector<8x128xf32> to vector<8x32xf32>
    %476 = arith.mulf %465, %475 : vector<8x32xf32>
    %477 = arith.addf %474, %476 : vector<8x32xf32>
    %478 = math.tanh %477 : vector<8x32xf32>
    %479 = arith.subf %419, %478 : vector<8x32xf32>
    %480 = arith.mulf %473, %479 : vector<8x32xf32>
    %481 = arith.addf %478, %480 : vector<8x32xf32>
    %482 = arith.truncf %481 : vector<8x32xf32> to vector<8x32xbf16>
    %cst_81 = arith.constant dense<0.000000e+00> : vector<8x128xf32>
    %483 = tpu.matmul %482, %2, %cst_81 {dimension_numbers = #tpu.dot_dimension_numbers<[1], [0], [0], [1], [0, 0, 1, 1], [], []>} : vector<8x32xbf16>, vector<32x128xbf16>, vector<8x128xf32> -> vector<8x128xf32>
    %484 = vector.broadcast %7 : vector<1x128xf32> to vector<8x128xf32>
    %485 = arith.addf %483, %484 : vector<8x128xf32>
    %486 = arith.truncf %451 : vector<8x32xf32> to vector<8x32xbf16>
    %cst_82 = arith.constant dense<0.000000e+00> : vector<8x128xf32>
    %487 = tpu.matmul %486, %3, %cst_82 {dimension_numbers = #tpu.dot_dimension_numbers<[1], [0], [0], [1], [0, 0, 1, 1], [], []>} : vector<8x32xbf16>, vector<32x128xbf16>, vector<8x128xf32> -> vector<8x128xf32>
    %488 = vector.broadcast %8 : vector<1x128xf32> to vector<8x128xf32>
    %489 = arith.addf %487, %488 : vector<8x128xf32>
    %490 = vector.extract_strided_slice %485 {offsets = [0, 0], sizes = [8, 32], strides = [1, 1]} : vector<8x128xf32> to vector<8x32xf32>
    %491 = vector.extract_strided_slice %489 {offsets = [0, 0], sizes = [8, 32], strides = [1, 1]} : vector<8x128xf32> to vector<8x32xf32>
    %492 = arith.addf %490, %491 : vector<8x32xf32>
    %493 = arith.negf %492 : vector<8x32xf32>
    %494 = math.exp %493 : vector<8x32xf32>
    %cst_83 = arith.constant 1.000000e+00 : f32
    %495 = vector.broadcast %cst_83 : f32 to vector<8x32xf32>
    %496 = arith.addf %495, %494 : vector<8x32xf32>
    %497 = arith.divf %495, %496 : vector<8x32xf32>
    %498 = vector.extract_strided_slice %485 {offsets = [0, 32], sizes = [8, 32], strides = [1, 1]} : vector<8x128xf32> to vector<8x32xf32>
    %499 = vector.extract_strided_slice %489 {offsets = [0, 32], sizes = [8, 32], strides = [1, 1]} : vector<8x128xf32> to vector<8x32xf32>
    %500 = arith.addf %498, %499 : vector<8x32xf32>
    %501 = arith.negf %500 : vector<8x32xf32>
    %502 = math.exp %501 : vector<8x32xf32>
    %cst_84 = arith.constant 1.000000e+00 : f32
    %503 = vector.broadcast %cst_84 : f32 to vector<8x32xf32>
    %504 = arith.addf %503, %502 : vector<8x32xf32>
    %505 = arith.divf %503, %504 : vector<8x32xf32>
    %506 = vector.extract_strided_slice %485 {offsets = [0, 64], sizes = [8, 32], strides = [1, 1]} : vector<8x128xf32> to vector<8x32xf32>
    %507 = vector.extract_strided_slice %489 {offsets = [0, 64], sizes = [8, 32], strides = [1, 1]} : vector<8x128xf32> to vector<8x32xf32>
    %508 = arith.mulf %497, %507 : vector<8x32xf32>
    %509 = arith.addf %506, %508 : vector<8x32xf32>
    %510 = math.tanh %509 : vector<8x32xf32>
    %511 = arith.subf %451, %510 : vector<8x32xf32>
    %512 = arith.mulf %505, %511 : vector<8x32xf32>
    %513 = arith.addf %510, %512 : vector<8x32xf32>
    %c56 = arith.constant 56 : index
    %c0_85 = arith.constant 0 : index
    %514 = vector.load %arg6[%c56, %c0_85] : memref<64x32xf32, #tpu.memory_space<vmem>>, vector<8x32xf32>
    tpu.vector_store %arg6[%c56, %c0_85], %513 {strides = array<i32>} : memref<64x32xf32, #tpu.memory_space<vmem>>, vector<8x32xf32>,
    %c0_86 = arith.constant 0 : index
    %c0_87 = arith.constant 0 : index
    %515 = vector.load %arg6[%c0_86, %c0_87] : memref<64x32xf32, #tpu.memory_space<vmem>>, vector<64x32xf32>
    %516 = arith.truncf %515 : vector<64x32xf32> to vector<64x32xbf16>
    %cst_88 = arith.constant dense<0.000000e+00> : vector<64x128xf32>
    %517 = tpu.matmul %516, %4, %cst_88 {dimension_numbers = #tpu.dot_dimension_numbers<[1], [0], [0], [1], [0, 0, 1, 1], [], []>} : vector<64x32xbf16>, vector<32x128xbf16>, vector<64x128xf32> -> vector<64x128xf32>
    %518 = vector.broadcast %9 : vector<1x128xf32> to vector<64x128xf32>
    %519 = arith.addf %517, %518 : vector<64x128xf32>
    %c0_89 = arith.constant 0 : index
    %c0_90 = arith.constant 0 : index
    %520 = vector.load %arg4[%c0_89, %c0_90] : memref<64x128xf32, #tpu.memory_space<vmem>>, vector<64x128xf32>
    tpu.vector_store %arg4[%c0_89, %c0_90], %519 {strides = array<i32>} : memref<64x128xf32, #tpu.memory_space<vmem>>, vector<64x128xf32>,
    %c0_91 = arith.constant 0 : index
    %c0_92 = arith.constant 0 : index
    %c0_93 = arith.constant 0 : index
    %521 = vector.load %arg5[%c0_91, %c0_92, %c0_93] : memref<2x8x32xf32, #tpu.memory_space<vmem>>, vector<1x8x32xf32>
    %522 = vector.shape_cast %521 : vector<1x8x32xf32> to vector<8x32xf32>
    %523 = vector.shape_cast %481 : vector<8x32xf32> to vector<1x8x32xf32>
    tpu.vector_store %arg5[%c0_91, %c0_92, %c0_93], %523 {strides = array<i32>} : memref<2x8x32xf32, #tpu.memory_space<vmem>>, vector<1x8x32xf32>,
    %c1_94 = arith.constant 1 : index
    %c0_95 = arith.constant 0 : index
    %c0_96 = arith.constant 0 : index
    %524 = vector.load %arg5[%c1_94, %c0_95, %c0_96] : memref<2x8x32xf32, #tpu.memory_space<vmem>>, vector<1x8x32xf32>
    %525 = vector.shape_cast %524 : vector<1x8x32xf32> to vector<8x32xf32>
    %526 = vector.shape_cast %513 : vector<8x32xf32> to vector<1x8x32xf32>
    tpu.vector_store %arg5[%c1_94, %c0_95, %c0_96], %526 {strides = array<i32>} : memref<2x8x32xf32, #tpu.memory_space<vmem>>, vector<1x8x32xf32>,
    return
  }
}

</mosaic_0001>

<llo_original>
// kernel: rnn_forward.1
$region0: #{rnn_forward.1}
  #allocation0 [shape = 'u32[]', space=smem, size = 0x4, offset = 0x4, fixed_abs, tag = 'smem constant byte address 0x4 - core index']
  #allocation1 [shape = 'u32[72,128]{1,0:T(1,128)}', space=vmem, size = 0x9000, scoped, tag = 'internal scratch']
  #allocation2 [shape = 'f32[64,32]{1,0:T(8,128)}', space=vmem, size = 0x8000, scoped, tag = 'scratch operand']
  %s0 = inlined_call_operand.vmem [shape: f32[64,16], index: 0, kind: input, shape index: {}]
  %s1 = inlined_call_operand.vmem [shape: f32[2,8,32], index: 1, kind: input, shape index: {}]
  %s2 = inlined_call_operand.vmem [shape: bf16[144,128], index: 2, kind: input, shape index: {}]
  %s3 = inlined_call_operand.vmem [shape: f32[8,128], index: 3, kind: input, shape index: {}]
  %s4 = inlined_call_operand.vmem [shape: f32[64,128], index: 4, kind: output, shape index: {0}]
  %s5 = inlined_call_operand.vmem [shape: f32[2,8,32], index: 5, kind: output, shape index: {1}]
  %6 = xla_tuple %s4, %s5
  %s7 = sld [smem:[#allocation0]]
  $region34: #{rnn_forward.1} parent=0
    _
  %s9 = ssub.s32 1, %s7
  %s10 = scalar_select 0, %s9, %s7
  // Predicated region
  $region2: #{rnn_forward.1} parent=0 // pred_check
    _
  $region3: #{rnn_forward.1} parent=0 // pred_check_branch
    %12 = sbr.rel (0) target = $region5
  $region4: #{rnn_forward.1} parent=0 // pred_region
    _
  $region5: #{rnn_forward.1} parent=0 // pred_fallthru
    _
  // Predicated region
  $region6: #{rnn_forward.1} parent=0 // pred_check
    _
  $region7: #{rnn_forward.1} parent=0 // pred_check_branch
    %14 = sbr.rel (0) target = $region9
  $region8: #{rnn_forward.1} parent=0 // pred_region
    _
  $region9: #{rnn_forward.1} parent=0 // pred_fallthru
    _
  // Predicated region
  $region10: #{rnn_forward.1} parent=0 // pred_check
    _
  $region11: #{rnn_forward.1} parent=0 // pred_check_branch
    %16 = sbr.rel (0) target = $region13
  $region12: #{rnn_forward.1} parent=0 // pred_region
    _
  $region13: #{rnn_forward.1} parent=0 // pred_fallthru
    _
  // Predicated region
  $region14: #{rnn_forward.1} parent=0 // pred_check
    _
  $region15: #{rnn_forward.1} parent=0 // pred_check_branch
    %18 = sbr.rel (0) target = $region17
  $region16: #{rnn_forward.1} parent=0 // pred_region
    _
  $region17: #{rnn_forward.1} parent=0 // pred_fallthru
    _
  %v20 = vld [vmem:[%s2] sm:$0xf]
  %v21 = vld [vmem:[%s2 + $0x4] sm:$0xf]
  %v22 = vld [vmem:[%s2 + $0x8] sm:$0xf]
  %v23 = vld [vmem:[%s2 + $0xc] sm:$0xf]
  %v24 = vld [vmem:[%s2 + $0x10] sm:$0xf]
  %v25 = vld [vmem:[%s2 + $0x14] sm:$0xf]
  %v26 = vld [vmem:[%s2 + $0x18] sm:$0xf]
  %v27 = vld [vmem:[%s2 + $0x1c] sm:$0xf]
  %v28 = vld [vmem:[%s2 + $0x20] sm:$0xf]
  %v29 = vld [vmem:[%s2 + $0x24] sm:$0xf]
  %v30 = vld [vmem:[%s2 + $0x28] sm:$0xf]
  %v31 = vld [vmem:[%s2 + $0x2c] sm:$0xf]
  %v32 = vld [vmem:[%s2 + $0x30] sm:$0xf]
  %v33 = vld [vmem:[%s2 + $0x34] sm:$0xf]
  %v34 = vld [vmem:[%s2 + $0x38] sm:$0xf]
  %v35 = vld [vmem:[%s2 + $0x3c] sm:$0xf]
  %v36 = vld [vmem:[%s2 + $0x40] sm:$0xf]
  %v37 = vld [vmem:[%s2 + $0x44] sm:$0xf]
  %v38 = vld [vmem:[%s3] sm:$0x1]
  %v39 = vld [vmem:[%s3 + $0x1] sm:$0x1]
  %v40 = vld [vmem:[%s3 + $0x2] sm:$0x1]
  %v41 = vld [vmem:[%s3 + $0x3] sm:$0x1]
  %v42 = vld [vmem:[%s3 + $0x4] sm:$0x1]
  %v43 = vld [vmem:[%s0] sm:$0xff]
  %v44 = vld [vmem:[%s0 + $0x8] sm:$0xff]
  %v45 = vld [vmem:[%s0 + $0x10] sm:$0xff]
  %v46 = vld [vmem:[%s0 + $0x18] sm:$0xff]
  %v47 = vld [vmem:[%s0 + $0x20] sm:$0xff]
  %v48 = vld [vmem:[%s0 + $0x28] sm:$0xff]
  %v49 = vld [vmem:[%s0 + $0x30] sm:$0xff]
  %v50 = vld [vmem:[%s0 + $0x38] sm:$0xff]
  %v51 = vpack.c.bf16 %v44, %v43
  %v52 = vpack.c.bf16 %v46, %v45
  %v53 = vpack.c.bf16 %v48, %v47
  %v54 = vpack.c.bf16 %v50, %v49
  %v55 = vperm.slane %v38, 0
  %v58 = vunpack.c.l.b16 %v20
  %v59 = vunpack.c.l.b16 %v21
  %v60 = vpack.c.b16 %v59, %v58
  %vm62 = vcmask 130048
  %v64 = vsel %vm62, %v51, 0
  %v67 = vsel %vm62, %v52, 0
  %v70 = vsel %vm62, %v53, 0
  %v73 = vsel %vm62, %v54, 0
  %75 = vmatpush.bf16.msra.mxu0 0
  %76 = vmatpush.bf16.msra.mxu0 0
  %77 = vmatpush.bf16.msra.mxu0 0
  %78 = vmatpush.bf16.msra.mxu0 0
  %79 = vmatpush.bf16.msra.mxu0 0
  %80 = vmatpush.bf16.msra.mxu0 0
  %81 = vmatpush.bf16.msra.mxu0 0
  %82 = vmatpush.bf16.msra.mxu0 %v60
  %83 = vmatmul.bf16.gmra.mxu0 %v64
  %v84 = vpop.f32.mrf.mxu0
  %v85 = vadd.f32 %v55, %v84
  %v86 = vpop.f32.mrf.mxu0
  %v87 = vadd.f32 %v55, %v86
  %88 = vmatmul.bf16.gmra.mxu0 %v67
  %v89 = vpop.f32.mrf.mxu0
  %v90 = vadd.f32 %v55, %v89
  %v91 = vpop.f32.mrf.mxu0
  %v92 = vadd.f32 %v55, %v91
  %93 = vmatmul.bf16.gmra.mxu0 %v70
  %v94 = vpop.f32.mrf.mxu0
  %v95 = vadd.f32 %v55, %v94
  %v96 = vpop.f32.mrf.mxu0
  %v97 = vadd.f32 %v55, %v96
  %98 = vmatmul.bf16.gmra.mxu0 %v73
  %v99 = vpop.f32.mrf.mxu0
  %v100 = vadd.f32 %v55, %v99
  %v101 = vpop.f32.mrf.mxu0
  %v102 = vadd.f32 %v55, %v101
  %103 = vdwg.mxu0
  %v104 = vld [vmem:[%s1] sm:$0xff]
  %s105 = scalar_lea.vmem %s1, 8
  %v106 = vld [vmem:[%s105] sm:$0xff]
  %v107 = vpack.c.bf16 %v104, %v104
  %v108 = vperm.slane %v39, 0
  %v113 = vunpack.c.l.b16 %v22
  %v114 = vunpack.c.l.b16 %v23
  %v115 = vunpack.c.l.b16 %v24
  %v116 = vunpack.c.l.b16 %v25
  %v117 = vpack.c.b16 %v114, %v113
  %v118 = vpack.c.b16 %v116, %v115
  %vm121 = vcmask 261120
  %v123 = vsel %vm121, %v107, 0
  %125 = vmatpush.bf16.msra.mxu0 0
  %126 = vmatpush.bf16.msra.mxu0 0
  %127 = vmatpush.bf16.msra.mxu0 0
  %128 = vmatpush.bf16.msra.mxu0 0
  %129 = vmatpush.bf16.msra.mxu0 0
  %130 = vmatpush.bf16.msra.mxu0 0
  %131 = vmatpush.bf16.msra.mxu0 %v118
  %132 = vmatpush.bf16.msra.mxu0 %v117
  %133 = vmatmul.bf16.gmra.mxu0 %v123
  %v134 = vpop.f32.mrf.mxu0
  %v135 = vadd.f32 %v108, %v134
  %v136 = vpop.f32.mrf.mxu0
  %137 = vdwg.mxu0
  %v138 = vadd.f32 %v85, %v135
  %v139 = vxor.u32 %v138, 2147483648
  %v140 = vmul.f32 %v139, 1.442695
  %v141 = vpow.pop %v140
  %v142 = vadd.f32 %v141, 1.0
  %v143 = vrcp.pop %v142
  %v144 = vmul.f32 %v142, %v143
  %v145 = vsub.f32 1.0, %v144
  %v146 = vmul.f32 %v143, %v145
  %v147 = vadd.f32 %v143, %v146
  %vm148 = vweird.f32 %v142
  %vm149 = vweird.f32 %v143
  %vm150 = vmor %vm148, %vm149
  %v151 = vsel %vm150, %v143, %v147
  %v152 = vand.u32 2147483647, %v142
  %vm153 = vcmp.eq.f32.partialorder %v152, 8.507059e+37
  %v154 = vand.u32 %v142, 2147483648
  %v155 = vor.u32 1.1754944e-38, %v154
  %v156 = vsel %vm153, %v155, %v151
  %v157 = vmul.f32 1.0, %v156
  %159 = vrot.lane.b32.xlu0 %v135, 64
  %v160 = vpop.permute.xlu0 %159
  %v162 = vmul.f32 %v157, %v160
  %164 = vrot.lane.b32.xlu0 %v162, 64
  %v165 = vpop.permute.xlu0 %164
  %v167 = vadd.f32 %v85, %v165
  %v168 = vtanh.pop %v167
  %170 = vrot.lane.b32.xlu0 %v168, 64
  %v171 = vpop.permute.xlu0 %170
  %v173 = vsub.f32 %v104, %v171
  %175 = vrot.lane.b32.xlu0 %v173, 32
  %v176 = vpop.permute.xlu0 %175
  %v178 = vmul.f32 %v157, %v176
  %180 = vrot.lane.b32.xlu0 %v178, 32
  %v181 = vpop.permute.xlu0 %180
  %v183 = vadd.f32 %v168, %v181
  %v184 = vpack.c.bf16 %v183, %v183
  %v185 = vperm.slane %v40, 0
  %187 = vrot.lane.b32.xlu0 %v184, 64
  %v188 = vpop.permute.xlu0 %187
  %v193 = vunpack.c.l.b16 %v26
  %v194 = vunpack.c.l.b16 %v27
  %v195 = vunpack.c.l.b16 %v28
  %v196 = vunpack.c.l.b16 %v29
  %v197 = vpack.c.b16 %v194, %v193
  %v198 = vpack.c.b16 %v196, %v195
  %v202 = vsel %vm121, %v188, 0
  %204 = vmatpush.bf16.msra.mxu0 0
  %205 = vmatpush.bf16.msra.mxu0 0
  %206 = vmatpush.bf16.msra.mxu0 0
  %207 = vmatpush.bf16.msra.mxu0 0
  %208 = vmatpush.bf16.msra.mxu0 0
  %209 = vmatpush.bf16.msra.mxu0 0
  %210 = vmatpush.bf16.msra.mxu0 %v198
  %211 = vmatpush.bf16.msra.mxu0 %v197
  %212 = vmatmul.bf16.gmra.mxu0 %v202
  %v213 = vpop.f32.mrf.mxu0
  %v214 = vadd.f32 %v185, %v213
  %v215 = vpop.f32.mrf.mxu0
  %216 = vdwg.mxu0
  %v217 = vpack.c.bf16 %v106, %v106
  %v218 = vperm.slane %v41, 0
  %v223 = vunpack.c.l.b16 %v30
  %v224 = vunpack.c.l.b16 %v31
  %v225 = vunpack.c.l.b16 %v32
  %v226 = vunpack.c.l.b16 %v33
  %v227 = vpack.c.b16 %v224, %v223
  %v228 = vpack.c.b16 %v226, %v225
  %v232 = vsel %vm121, %v217, 0
  %234 = vmatpush.bf16.msra.mxu0 0
  %235 = vmatpush.bf16.msra.mxu0 0
  %236 = vmatpush.bf16.msra.mxu0 0
  %237 = vmatpush.bf16.msra.mxu0 0
  %238 = vmatpush.bf16.msra.mxu0 0
  %239 = vmatpush.bf16.msra.mxu0 0
  %240 = vmatpush.bf16.msra.mxu0 %v228
  %241 = vmatpush.bf16.msra.mxu0 %v227
  %242 = vmatmul.bf16.gmra.mxu0 %v232
  %v243 = vpop.f32.mrf.mxu0
  %v244 = vadd.f32 %v218, %v243
  %v245 = vpop.f32.mrf.mxu0
  %246 = vdwg.mxu0
  %v247 = vadd.f32 %v214, %v244
  %v248 = vxor.u32 %v247, 2147483648
  %v249 = vmul.f32 %v248, 1.442695
  %v250 = vpow.pop %v249
  %v251 = vadd.f32 %v250, 1.0
  %v252 = vrcp.pop %v251
  %v253 = vmul.f32 %v251, %v252
  %v254 = vsub.f32 1.0, %v253
  %v255 = vmul.f32 %v252, %v254
  %v256 = vadd.f32 %v252, %v255
  %vm257 = vweird.f32 %v251
  %vm258 = vweird.f32 %v252
  %vm259 = vmor %vm257, %vm258
  %v260 = vsel %vm259, %v252, %v256
  %v261 = vand.u32 2147483647, %v251
  %vm262 = vcmp.eq.f32.partialorder %v261, 8.507059e+37
  %v263 = vand.u32 %v251, 2147483648
  %v264 = vor.u32 1.1754944e-38, %v263
  %v265 = vsel %vm262, %v264, %v260
  %v266 = vmul.f32 1.0, %v265
  %268 = vrot.lane.b32.xlu0 %v244, 64
  %v269 = vpop.permute.xlu0 %268
  %v271 = vmul.f32 %v266, %v269
  %273 = vrot.lane.b32.xlu0 %v271, 64
  %v274 = vpop.permute.xlu0 %273
  %v276 = vadd.f32 %v214, %v274
  %v277 = vtanh.pop %v276
  %279 = vrot.lane.b32.xlu0 %v277, 64
  %v280 = vpop.permute.xlu0 %279
  %v282 = vsub.f32 %v106, %v280
  %284 = vrot.lane.b32.xlu0 %v282, 32
  %v285 = vpop.permute.xlu0 %284
  %v287 = vmul.f32 %v266, %v285
  %289 = vrot.lane.b32.xlu0 %v287, 32
  %v290 = vpop.permute.xlu0 %289
  %v292 = vadd.f32 %v277, %v290
  %294 = vrot.lane.b32.xlu0 %v292, 64
  %v295 = vpop.permute.xlu0 %294
  %297 = vst.msk [vmem:[#allocation2] sm:$0xff] %vm121, %v295
  %298 = vmatpush.bf16.msra.mxu0 0
  %299 = vmatpush.bf16.msra.mxu0 0
  %300 = vmatpush.bf16.msra.mxu0 0
  %301 = vmatpush.bf16.msra.mxu0 0
  %302 = vmatpush.bf16.msra.mxu0 0
  %303 = vmatpush.bf16.msra.mxu0 0
  %304 = vmatpush.bf16.msra.mxu0 %v118
  %305 = vmatpush.bf16.msra.mxu0 %v117
  %306 = vmatmul.bf16.gmra.mxu0 %v202
  %v307 = vpop.f32.mrf.mxu0
  %v308 = vadd.f32 %v108, %v307
  %v309 = vpop.f32.mrf.mxu0
  %310 = vdwg.mxu0
  %v311 = vadd.f32 %v87, %v308
  %v312 = vxor.u32 %v311, 2147483648
  %v313 = vmul.f32 %v312, 1.442695
  %v314 = vpow.pop %v313
  %v315 = vadd.f32 %v314, 1.0
  %v316 = vrcp.pop %v315
  %v317 = vmul.f32 %v315, %v316
  %v318 = vsub.f32 1.0, %v317
  %v319 = vmul.f32 %v316, %v318
  %v320 = vadd.f32 %v316, %v319
  %vm321 = vweird.f32 %v315
  %vm322 = vweird.f32 %v316
  %vm323 = vmor %vm321, %vm322
  %v324 = vsel %vm323, %v316, %v320
  %v325 = vand.u32 2147483647, %v315
  %vm326 = vcmp.eq.f32.partialorder %v325, 8.507059e+37
  %v327 = vand.u32 %v315, 2147483648
  %v328 = vor.u32 1.1754944e-38, %v327
  %v329 = vsel %vm326, %v328, %v324
  %v330 = vmul.f32 1.0, %v329
  %332 = vrot.lane.b32.xlu0 %v308, 64
  %v333 = vpop.permute.xlu0 %332
  %v335 = vmul.f32 %v330, %v333
  %337 = vrot.lane.b32.xlu0 %v335, 64
  %v338 = vpop.permute.xlu0 %337
  %v340 = vadd.f32 %v87, %v338
  %v341 = vtanh.pop %v340
  %v342 = vsub.f32 %v183, %v341
  %344 = vrot.lane.b32.xlu0 %v342, 96
  %v345 = vpop.permute.xlu0 %344
  %v347 = vmul.f32 %v330, %v345
  %349 = vrot.lane.b32.xlu0 %v347, 32
  %v350 = vpop.permute.xlu0 %349
  %v352 = vadd.f32 %v341, %v350
  %v353 = vpack.c.bf16 %v352, %v352
  %355 = vrot.lane.b32.xlu0 %v353, 64
  %v356 = vpop.permute.xlu0 %355
  %v358 = vsel %vm121, %v356, 0
  %360 = vmatpush.bf16.msra.mxu0 0
  %361 = vmatpush.bf16.msra.mxu0 0
  %362 = vmatpush.bf16.msra.mxu0 0
  %363 = vmatpush.bf16.msra.mxu0 0
  %364 = vmatpush.bf16.msra.mxu0 0
  %365 = vmatpush.bf16.msra.mxu0 0
  %366 = vmatpush.bf16.msra.mxu0 %v198
  %367 = vmatpush.bf16.msra.mxu0 %v197
  %368 = vmatmul.bf16.gmra.mxu0 %v358
  %v369 = vpop.f32.mrf.mxu0
  %v370 = vadd.f32 %v185, %v369
  %v371 = vpop.f32.mrf.mxu0
  %372 = vdwg.mxu0
  %v373 = vpack.c.bf16 %v292, %v292
  %375 = vrot.lane.b32.xlu0 %v373, 64
  %v376 = vpop.permute.xlu0 %375
  %v378 = vsel %vm121, %v376, 0
  %380 = vmatpush.bf16.msra.mxu0 0
  %381 = vmatpush.bf16.msra.mxu0 0
  %382 = vmatpush.bf16.msra.mxu0 0
  %383 = vmatpush.bf16.msra.mxu0 0
  %384 = vmatpush.bf16.msra.mxu0 0
  %385 = vmatpush.bf16.msra.mxu0 0
  %386 = vmatpush.bf16.msra.mxu0 %v228
  %387 = vmatpush.bf16.msra.mxu0 %v227
  %388 = vmatmul.bf16.gmra.mxu0 %v378
  %v389 = vpop.f32.mrf.mxu0
  %v390 = vadd.f32 %v218, %v389
  %v391 = vpop.f32.mrf.mxu0
  %392 = vdwg.mxu0
  %v393 = vadd.f32 %v370, %v390
  %v394 = vxor.u32 %v393, 2147483648
  %v395 = vmul.f32 %v394, 1.442695
  %v396 = vpow.pop %v395
  %v397 = vadd.f32 %v396, 1.0
  %v398 = vrcp.pop %v397
  %v399 = vmul.f32 %v397, %v398
  %v400 = vsub.f32 1.0, %v399
  %v401 = vmul.f32 %v398, %v400
  %v402 = vadd.f32 %v398, %v401
  %vm403 = vweird.f32 %v397
  %vm404 = vweird.f32 %v398
  %vm405 = vmor %vm403, %vm404
  %v406 = vsel %vm405, %v398, %v402
  %v407 = vand.u32 2147483647, %v397
  %vm408 = vcmp.eq.f32.partialorder %v407, 8.507059e+37
  %v409 = vand.u32 %v397, 2147483648
  %v410 = vor.u32 1.1754944e-38, %v409
  %v411 = vsel %vm408, %v410, %v406
  %v412 = vmul.f32 1.0, %v411
  %414 = vrot.lane.b32.xlu0 %v390, 64
  %v415 = vpop.permute.xlu0 %414
  %v417 = vmul.f32 %v412, %v415
  %419 = vrot.lane.b32.xlu0 %v417, 64
  %v420 = vpop.permute.xlu0 %419
  %v422 = vadd.f32 %v370, %v420
  %v423 = vtanh.pop %v422
  %v424 = vsub.f32 %v292, %v423
  %426 = vrot.lane.b32.xlu0 %v424, 96
  %v427 = vpop.permute.xlu0 %426
  %v429 = vmul.f32 %v412, %v427
  %431 = vrot.lane.b32.xlu0 %v429, 32
  %v432 = vpop.permute.xlu0 %431
  %v434 = vadd.f32 %v423, %v432
  %436 = vrot.lane.b32.xlu0 %v434, 64
  %v437 = vpop.permute.xlu0 %436
  %439 = vst.msk [vmem:[#allocation2 + $0x8] sm:$0xff] %vm121, %v437
  %440 = vmatpush.bf16.msra.mxu0 0
  %441 = vmatpush.bf16.msra.mxu0 0
  %442 = vmatpush.bf16.msra.mxu0 0
  %443 = vmatpush.bf16.msra.mxu0 0
  %444 = vmatpush.bf16.msra.mxu0 0
  %445 = vmatpush.bf16.msra.mxu0 0
  %446 = vmatpush.bf16.msra.mxu0 %v118
  %447 = vmatpush.bf16.msra.mxu0 %v117
  %448 = vmatmul.bf16.gmra.mxu0 %v358
  %v449 = vpop.f32.mrf.mxu0
  %v450 = vadd.f32 %v108, %v449
  %v451 = vpop.f32.mrf.mxu0
  %452 = vdwg.mxu0
  %v453 = vadd.f32 %v90, %v450
  %v454 = vxor.u32 %v453, 2147483648
  %v455 = vmul.f32 %v454, 1.442695
  %v456 = vpow.pop %v455
  %v457 = vadd.f32 %v456, 1.0
  %v458 = vrcp.pop %v457
  %v459 = vmul.f32 %v457, %v458
  %v460 = vsub.f32 1.0, %v459
  %v461 = vmul.f32 %v458, %v460
  %v462 = vadd.f32 %v458, %v461
  %vm463 = vweird.f32 %v457
  %vm464 = vweird.f32 %v458
  %vm465 = vmor %vm463, %vm464
  %v466 = vsel %vm465, %v458, %v462
  %v467 = vand.u32 2147483647, %v457
  %vm468 = vcmp.eq.f32.partialorder %v467, 8.507059e+37
  %v469 = vand.u32 %v457, 2147483648
  %v470 = vor.u32 1.1754944e-38, %v469
  %v471 = vsel %vm468, %v470, %v466
  %v472 = vmul.f32 1.0, %v471
  %474 = vrot.lane.b32.xlu0 %v450, 64
  %v475 = vpop.permute.xlu0 %474
  %v477 = vmul.f32 %v472, %v475
  %479 = vrot.lane.b32.xlu0 %v477, 64
  %v480 = vpop.permute.xlu0 %479
  %v482 = vadd.f32 %v90, %v480
  %v483 = vtanh.pop %v482
  %v484 = vsub.f32 %v352, %v483
  %486 = vrot.lane.b32.xlu0 %v484, 96
  %v487 = vpop.permute.xlu0 %486
  %v489 = vmul.f32 %v472, %v487
  %491 = vrot.lane.b32.xlu0 %v489, 32
  %v492 = vpop.permute.xlu0 %491
  %v494 = vadd.f32 %v483, %v492
  %v495 = vpack.c.bf16 %v494, %v494
  %497 = vrot.lane.b32.xlu0 %v495, 64
  %v498 = vpop.permute.xlu0 %497
  %v500 = vsel %vm121, %v498, 0
  %502 = vmatpush.bf16.msra.mxu0 0
  %503 = vmatpush.bf16.msra.mxu0 0
  %504 = vmatpush.bf16.msra.mxu0 0
  %505 = vmatpush.bf16.msra.mxu0 0
  %506 = vmatpush.bf16.msra.mxu0 0
  %507 = vmatpush.bf16.msra.mxu0 0
  %508 = vmatpush.bf16.msra.mxu0 %v198
  %509 = vmatpush.bf16.msra.mxu0 %v197
  %510 = vmatmul.bf16.gmra.mxu0 %v500
  %v511 = vpop.f32.mrf.mxu0
  %v512 = vadd.f32 %v185, %v511
  %v513 = vpop.f32.mrf.mxu0
  %514 = vdwg.mxu0
  %v515 = vpack.c.bf16 %v434, %v434
  %517 = vrot.lane.b32.xlu0 %v515, 64
  %v518 = vpop.permute.xlu0 %517
  %v520 = vsel %vm121, %v518, 0
  %522 = vmatpush.bf16.msra.mxu0 0
  %523 = vmatpush.bf16.msra.mxu0 0
  %524 = vmatpush.bf16.msra.mxu0 0
  %525 = vmatpush.bf16.msra.mxu0 0
  %526 = vmatpush.bf16.msra.mxu0 0
  %527 = vmatpush.bf16.msra.mxu0 0
  %528 = vmatpush.bf16.msra.mxu0 %v228
  %529 = vmatpush.bf16.msra.mxu0 %v227
  %530 = vmatmul.bf16.gmra.mxu0 %v520
  %v531 = vpop.f32.mrf.mxu0
  %v532 = vadd.f32 %v218, %v531
  %v533 = vpop.f32.mrf.mxu0
  %534 = vdwg.mxu0
  %v535 = vadd.f32 %v512, %v532
  %v536 = vxor.u32 %v535, 2147483648
  %v537 = vmul.f32 %v536, 1.442695
  %v538 = vpow.pop %v537
  %v539 = vadd.f32 %v538, 1.0
  %v540 = vrcp.pop %v539
  %v541 = vmul.f32 %v539, %v540
  %v542 = vsub.f32 1.0, %v541
  %v543 = vmul.f32 %v540, %v542
  %v544 = vadd.f32 %v540, %v543
  %vm545 = vweird.f32 %v539
  %vm546 = vweird.f32 %v540
  %vm547 = vmor %vm545, %vm546
  %v548 = vsel %vm547, %v540, %v544
  %v549 = vand.u32 2147483647, %v539
  %vm550 = vcmp.eq.f32.partialorder %v549, 8.507059e+37
  %v551 = vand.u32 %v539, 2147483648
  %v552 = vor.u32 1.1754944e-38, %v551
  %v553 = vsel %vm550, %v552, %v548
  %v554 = vmul.f32 1.0, %v553
  %556 = vrot.lane.b32.xlu0 %v532, 64
  %v557 = vpop.permute.xlu0 %556
  %v559 = vmul.f32 %v554, %v557
  %561 = vrot.lane.b32.xlu0 %v559, 64
  %v562 = vpop.permute.xlu0 %561
  %v564 = vadd.f32 %v512, %v562
  %v565 = vtanh.pop %v564
  %v566 = vsub.f32 %v434, %v565
  %568 = vrot.lane.b32.xlu0 %v566, 96
  %v569 = vpop.permute.xlu0 %568
  %v571 = vmul.f32 %v554, %v569
  %573 = vrot.lane.b32.xlu0 %v571, 32
  %v574 = vpop.permute.xlu0 %573
  %v576 = vadd.f32 %v565, %v574
  %578 = vrot.lane.b32.xlu0 %v576, 64
  %v579 = vpop.permute.xlu0 %578
  %581 = vst.msk [vmem:[#allocation2 + $0x10] sm:$0xff] %vm121, %v579
  %582 = vmatpush.bf16.msra.mxu0 0
  %583 = vmatpush.bf16.msra.mxu0 0
  %584 = vmatpush.bf16.msra.mxu0 0
  %585 = vmatpush.bf16.msra.mxu0 0
  %586 = vmatpush.bf16.msra.mxu0 0
  %587 = vmatpush.bf16.msra.mxu0 0
  %588 = vmatpush.bf16.msra.mxu0 %v118
  %589 = vmatpush.bf16.msra.mxu0 %v117
  %590 = vmatmul.bf16.gmra.mxu0 %v500
  %v591 = vpop.f32.mrf.mxu0
  %v592 = vadd.f32 %v108, %v591
  %v593 = vpop.f32.mrf.mxu0
  %594 = vdwg.mxu0
  %v595 = vadd.f32 %v92, %v592
  %v596 = vxor.u32 %v595, 2147483648
  %v597 = vmul.f32 %v596, 1.442695
  %v598 = vpow.pop %v597
  %v599 = vadd.f32 %v598, 1.0
  %v600 = vrcp.pop %v599
  %v601 = vmul.f32 %v599, %v600
  %v602 = vsub.f32 1.0, %v601
  %v603 = vmul.f32 %v600, %v602
  %v604 = vadd.f32 %v600, %v603
  %vm605 = vweird.f32 %v599
  %vm606 = vweird.f32 %v600
  %vm607 = vmor %vm605, %vm606
  %v608 = vsel %vm607, %v600, %v604
  %v609 = vand.u32 2147483647, %v599
  %vm610 = vcmp.eq.f32.partialorder %v609, 8.507059e+37
  %v611 = vand.u32 %v599, 2147483648
  %v612 = vor.u32 1.1754944e-38, %v611
  %v613 = vsel %vm610, %v612, %v608
  %v614 = vmul.f32 1.0, %v613
  %616 = vrot.lane.b32.xlu0 %v592, 64
  %v617 = vpop.permute.xlu0 %616
  %v619 = vmul.f32 %v614, %v617
  %621 = vrot.lane.b32.xlu0 %v619, 64
  %v622 = vpop.permute.xlu0 %621
  %v624 = vadd.f32 %v92, %v622
  %v625 = vtanh.pop %v624
  %v626 = vsub.f32 %v494, %v625
  %628 = vrot.lane.b32.xlu0 %v626, 96
  %v629 = vpop.permute.xlu0 %628
  %v631 = vmul.f32 %v614, %v629
  %633 = vrot.lane.b32.xlu0 %v631, 32
  %v634 = vpop.permute.xlu0 %633
  %v636 = vadd.f32 %v625, %v634
  %v637 = vpack.c.bf16 %v636, %v636
  %639 = vrot.lane.b32.xlu0 %v637, 64
  %v640 = vpop.permute.xlu0 %639
  %v642 = vsel %vm121, %v640, 0
  %644 = vmatpush.bf16.msra.mxu0 0
  %645 = vmatpush.bf16.msra.mxu0 0
  %646 = vmatpush.bf16.msra.mxu0 0
  %647 = vmatpush.bf16.msra.mxu0 0
  %648 = vmatpush.bf16.msra.mxu0 0
  %649 = vmatpush.bf16.msra.mxu0 0
  %650 = vmatpush.bf16.msra.mxu0 %v198
  %651 = vmatpush.bf16.msra.mxu0 %v197
  %652 = vmatmul.bf16.gmra.mxu0 %v642
  %v653 = vpop.f32.mrf.mxu0
  %v654 = vadd.f32 %v185, %v653
  %v655 = vpop.f32.mrf.mxu0
  %656 = vdwg.mxu0
  %v657 = vpack.c.bf16 %v576, %v576
  %659 = vrot.lane.b32.xlu0 %v657, 64
  %v660 = vpop.permute.xlu0 %659
  %v662 = vsel %vm121, %v660, 0
  %664 = vmatpush.bf16.msra.mxu0 0
  %665 = vmatpush.bf16.msra.mxu0 0
  %666 = vmatpush.bf16.msra.mxu0 0
  %667 = vmatpush.bf16.msra.mxu0 0
  %668 = vmatpush.bf16.msra.mxu0 0
  %669 = vmatpush.bf16.msra.mxu0 0
  %670 = vmatpush.bf16.msra.mxu0 %v228
  %671 = vmatpush.bf16.msra.mxu0 %v227
  %672 = vmatmul.bf16.gmra.mxu0 %v662
  %v673 = vpop.f32.mrf.mxu0
  %v674 = vadd.f32 %v218, %v673
  %v675 = vpop.f32.mrf.mxu0
  %676 = vdwg.mxu0
  %v677 = vadd.f32 %v654, %v674
  %v678 = vxor.u32 %v677, 2147483648
  %v679 = vmul.f32 %v678, 1.442695
  %v680 = vpow.pop %v679
  %v681 = vadd.f32 %v680, 1.0
  %v682 = vrcp.pop %v681
  %v683 = vmul.f32 %v681, %v682
  %v684 = vsub.f32 1.0, %v683
  %v685 = vmul.f32 %v682, %v684
  %v686 = vadd.f32 %v682, %v685
  %vm687 = vweird.f32 %v681
  %vm688 = vweird.f32 %v682
  %vm689 = vmor %vm687, %vm688
  %v690 = vsel %vm689, %v682, %v686
  %v691 = vand.u32 2147483647, %v681
  %vm692 = vcmp.eq.f32.partialorder %v691, 8.507059e+37
  %v693 = vand.u32 %v681, 2147483648
  %v694 = vor.u32 1.1754944e-38, %v693
  %v695 = vsel %vm692, %v694, %v690
  %v696 = vmul.f32 1.0, %v695
  %698 = vrot.lane.b32.xlu0 %v674, 64
  %v699 = vpop.permute.xlu0 %698
  %v701 = vmul.f32 %v696, %v699
  %703 = vrot.lane.b32.xlu0 %v701, 64
  %v704 = vpop.permute.xlu0 %703
  %v706 = vadd.f32 %v654, %v704
  %v707 = vtanh.pop %v706
  %v708 = vsub.f32 %v576, %v707
  %710 = vrot.lane.b32.xlu0 %v708, 96
  %v711 = vpop.permute.xlu0 %710
  %v713 = vmul.f32 %v696, %v711
  %715 = vrot.lane.b32.xlu0 %v713, 32
  %v716 = vpop.permute.xlu0 %715
  %v718 = vadd.f32 %v707, %v716
  %720 = vrot.lane.b32.xlu0 %v718, 64
  %v721 = vpop.permute.xlu0 %720
  %723 = vst.msk [vmem:[#allocation2 + $0x18] sm:$0xff] %vm121, %v721
  %724 = vmatpush.bf16.msra.mxu0 0
  %725 = vmatpush.bf16.msra.mxu0 0
  %726 = vmatpush.bf16.msra.mxu0 0
  %727 = vmatpush.bf16.msra.mxu0 0
  %728 = vmatpush.bf16.msra.mxu0 0
  %729 = vmatpush.bf16.msra.mxu0 0
  %730 = vmatpush.bf16.msra.mxu0 %v118
  %731 = vmatpush.bf16.msra.mxu0 %v117
  %732 = vmatmul.bf16.gmra.mxu0 %v642
  %v733 = vpop.f32.mrf.mxu0
  %v734 = vadd.f32 %v108, %v733
  %v735 = vpop.f32.mrf.mxu0
  %736 = vdwg.mxu0
  %v737 = vadd.f32 %v95, %v734
  %v738 = vxor.u32 %v737, 2147483648
  %v739 = vmul.f32 %v738, 1.442695
  %v740 = vpow.pop %v739
  %v741 = vadd.f32 %v740, 1.0
  %v742 = vrcp.pop %v741
  %v743 = vmul.f32 %v741, %v742
  %v744 = vsub.f32 1.0, %v743
  %v745 = vmul.f32 %v742, %v744
  %v746 = vadd.f32 %v742, %v745
  %vm747 = vweird.f32 %v741
  %vm748 = vweird.f32 %v742
  %vm749 = vmor %vm747, %vm748
  %v750 = vsel %vm749, %v742, %v746
  %v751 = vand.u32 2147483647, %v741
  %vm752 = vcmp.eq.f32.partialorder %v751, 8.507059e+37
  %v753 = vand.u32 %v741, 2147483648
  %v754 = vor.u32 1.1754944e-38, %v753
  %v755 = vsel %vm752, %v754, %v750
  %v756 = vmul.f32 1.0, %v755
  %758 = vrot.lane.b32.xlu0 %v734, 64
  %v759 = vpop.permute.xlu0 %758
  %v761 = vmul.f32 %v756, %v759
  %763 = vrot.lane.b32.xlu0 %v761, 64
  %v764 = vpop.permute.xlu0 %763
  %v766 = vadd.f32 %v95, %v764
  %v767 = vtanh.pop %v766
  %v768 = vsub.f32 %v636, %v767
  %770 = vrot.lane.b32.xlu0 %v768, 96
  %v771 = vpop.permute.xlu0 %770
  %v773 = vmul.f32 %v756, %v771
  %775 = vrot.lane.b32.xlu0 %v773, 32
  %v776 = vpop.permute.xlu0 %775
  %v778 = vadd.f32 %v767, %v776
  %v779 = vpack.c.bf16 %v778, %v778
  %781 = vrot.lane.b32.xlu0 %v779, 64
  %v782 = vpop.permute.xlu0 %781
  %v784 = vsel %vm121, %v782, 0
  %786 = vmatpush.bf16.msra.mxu0 0
  %787 = vmatpush.bf16.msra.mxu0 0
  %788 = vmatpush.bf16.msra.mxu0 0
  %789 = vmatpush.bf16.msra.mxu0 0
  %790 = vmatpush.bf16.msra.mxu0 0
  %791 = vmatpush.bf16.msra.mxu0 0
  %792 = vmatpush.bf16.msra.mxu0 %v198
  %793 = vmatpush.bf16.msra.mxu0 %v197
  %794 = vmatmul.bf16.gmra.mxu0 %v784
  %v795 = vpop.f32.mrf.mxu0
  %v796 = vadd.f32 %v185, %v795
  %v797 = vpop.f32.mrf.mxu0
  %798 = vdwg.mxu0
  %v799 = vpack.c.bf16 %v718, %v718
  %801 = vrot.lane.b32.xlu0 %v799, 64
  %v802 = vpop.permute.xlu0 %801
  %v804 = vsel %vm121, %v802, 0
  %806 = vmatpush.bf16.msra.mxu0 0
  %807 = vmatpush.bf16.msra.mxu0 0
  %808 = vmatpush.bf16.msra.mxu0 0
  %809 = vmatpush.bf16.msra.mxu0 0
  %810 = vmatpush.bf16.msra.mxu0 0
  %811 = vmatpush.bf16.msra.mxu0 0
  %812 = vmatpush.bf16.msra.mxu0 %v228
  %813 = vmatpush.bf16.msra.mxu0 %v227
  %814 = vmatmul.bf16.gmra.mxu0 %v804
  %v815 = vpop.f32.mrf.mxu0
  %v816 = vadd.f32 %v218, %v815
  %v817 = vpop.f32.mrf.mxu0
  %818 = vdwg.mxu0
  %v819 = vadd.f32 %v796, %v816
  %v820 = vxor.u32 %v819, 2147483648
  %v821 = vmul.f32 %v820, 1.442695
  %v822 = vpow.pop %v821
  %v823 = vadd.f32 %v822, 1.0
  %v824 = vrcp.pop %v823
  %v825 = vmul.f32 %v823, %v824
  %v826 = vsub.f32 1.0, %v825
  %v827 = vmul.f32 %v824, %v826
  %v828 = vadd.f32 %v824, %v827
  %vm829 = vweird.f32 %v823
  %vm830 = vweird.f32 %v824
  %vm831 = vmor %vm829, %vm830
  %v832 = vsel %vm831, %v824, %v828
  %v833 = vand.u32 2147483647, %v823
  %vm834 = vcmp.eq.f32.partialorder %v833, 8.507059e+37
  %v835 = vand.u32 %v823, 2147483648
  %v836 = vor.u32 1.1754944e-38, %v835
  %v837 = vsel %vm834, %v836, %v832
  %v838 = vmul.f32 1.0, %v837
  %840 = vrot.lane.b32.xlu0 %v816, 64
  %v841 = vpop.permute.xlu0 %840
  %v843 = vmul.f32 %v838, %v841
  %845 = vrot.lane.b32.xlu0 %v843, 64
  %v846 = vpop.permute.xlu0 %845
  %v848 = vadd.f32 %v796, %v846
  %v849 = vtanh.pop %v848
  %v850 = vsub.f32 %v718, %v849
  %852 = vrot.lane.b32.xlu0 %v850, 96
  %v853 = vpop.permute.xlu0 %852
  %v855 = vmul.f32 %v838, %v853
  %857 = vrot.lane.b32.xlu0 %v855, 32
  %v858 = vpop.permute.xlu0 %857
  %v860 = vadd.f32 %v849, %v858
  %862 = vrot.lane.b32.xlu0 %v860, 64
  %v863 = vpop.permute.xlu0 %862
  %865 = vst.msk [vmem:[#allocation2 + $0x20] sm:$0xff] %vm121, %v863
  %866 = vmatpush.bf16.msra.mxu0 0
  %867 = vmatpush.bf16.msra.mxu0 0
  %868 = vmatpush.bf16.msra.mxu0 0
  %869 = vmatpush.bf16.msra.mxu0 0
  %870 = vmatpush.bf16.msra.mxu0 0
  %871 = vmatpush.bf16.msra.mxu0 0
  %872 = vmatpush.bf16.msra.mxu0 %v118
  %873 = vmatpush.bf16.msra.mxu0 %v117
  %874 = vmatmul.bf16.gmra.mxu0 %v784
  %v875 = vpop.f32.mrf.mxu0
  %v876 = vadd.f32 %v108, %v875
  %v877 = vpop.f32.mrf.mxu0
  %878 = vdwg.mxu0
  %v879 = vadd.f32 %v97, %v876
  %v880 = vxor.u32 %v879, 2147483648
  %v881 = vmul.f32 %v880, 1.442695
  %v882 = vpow.pop %v881
  %v883 = vadd.f32 %v882, 1.0
  %v884 = vrcp.pop %v883
  %v885 = vmul.f32 %v883, %v884
  %v886 = vsub.f32 1.0, %v885
  %v887 = vmul.f32 %v884, %v886
  %v888 = vadd.f32 %v884, %v887
  %vm889 = vweird.f32 %v883
  %vm890 = vweird.f32 %v884
  %vm891 = vmor %vm889, %vm890
  %v892 = vsel %vm891, %v884, %v888
  %v893 = vand.u32 2147483647, %v883
  %vm894 = vcmp.eq.f32.partialorder %v893, 8.507059e+37
  %v895 = vand.u32 %v883, 2147483648
  %v896 = vor.u32 1.1754944e-38, %v895
  %v897 = vsel %vm894, %v896, %v892
  %v898 = vmul.f32 1.0, %v897
  %900 = vrot.lane.b32.xlu0 %v876, 64
  %v901 = vpop.permute.xlu0 %900
  %v903 = vmul.f32 %v898, %v901
  %905 = vrot.lane.b32.xlu0 %v903, 64
  %v906 = vpop.permute.xlu0 %905
  %v908 = vadd.f32 %v97, %v906
  %v909 = vtanh.pop %v908
  %v910 = vsub.f32 %v778, %v909
  %912 = vrot.lane.b32.xlu0 %v910, 96
  %v913 = vpop.permute.xlu0 %912
  %v915 = vmul.f32 %v898, %v913
  %917 = vrot.lane.b32.xlu0 %v915, 32
  %v918 = vpop.permute.xlu0 %917
  %v920 = vadd.f32 %v909, %v918
  %v921 = vpack.c.bf16 %v920, %v920
  %923 = vrot.lane.b32.xlu0 %v921, 64
  %v924 = vpop.permute.xlu0 %923
  %v926 = vsel %vm121, %v924, 0
  %928 = vmatpush.bf16.msra.mxu0 0
  %929 = vmatpush.bf16.msra.mxu0 0
  %930 = vmatpush.bf16.msra.mxu0 0
  %931 = vmatpush.bf16.msra.mxu0 0
  %932 = vmatpush.bf16.msra.mxu0 0
  %933 = vmatpush.bf16.msra.mxu0 0
  %934 = vmatpush.bf16.msra.mxu0 %v198
  %935 = vmatpush.bf16.msra.mxu0 %v197
  %936 = vmatmul.bf16.gmra.mxu0 %v926
  %v937 = vpop.f32.mrf.mxu0
  %v938 = vadd.f32 %v185, %v937
  %v939 = vpop.f32.mrf.mxu0
  %940 = vdwg.mxu0
  %v941 = vpack.c.bf16 %v860, %v860
  %943 = vrot.lane.b32.xlu0 %v941, 64
  %v944 = vpop.permute.xlu0 %943
  %v946 = vsel %vm121, %v944, 0
  %948 = vmatpush.bf16.msra.mxu0 0
  %949 = vmatpush.bf16.msra.mxu0 0
  %950 = vmatpush.bf16.msra.mxu0 0
  %951 = vmatpush.bf16.msra.mxu0 0
  %952 = vmatpush.bf16.msra.mxu0 0
  %953 = vmatpush.bf16.msra.mxu0 0
  %954 = vmatpush.bf16.msra.mxu0 %v228
  %955 = vmatpush.bf16.msra.mxu0 %v227
  %956 = vmatmul.bf16.gmra.mxu0 %v946
  %v957 = vpop.f32.mrf.mxu0
  %v958 = vadd.f32 %v218, %v957
  %v959 = vpop.f32.mrf.mxu0
  %960 = vdwg.mxu0
  %v961 = vadd.f32 %v938, %v958
  %v962 = vxor.u32 %v961, 2147483648
  %v963 = vmul.f32 %v962, 1.442695
  %v964 = vpow.pop %v963
  %v965 = vadd.f32 %v964, 1.0
  %v966 = vrcp.pop %v965
  %v967 = vmul.f32 %v965, %v966
  %v968 = vsub.f32 1.0, %v967
  %v969 = vmul.f32 %v966, %v968
  %v970 = vadd.f32 %v966, %v969
  %vm971 = vweird.f32 %v965
  %vm972 = vweird.f32 %v966
  %vm973 = vmor %vm971, %vm972
  %v974 = vsel %vm973, %v966, %v970
  %v975 = vand.u32 2147483647, %v965
  %vm976 = vcmp.eq.f32.partialorder %v975, 8.507059e+37
  %v977 = vand.u32 %v965, 2147483648
  %v978 = vor.u32 1.1754944e-38, %v977
  %v979 = vsel %vm976, %v978, %v974
  %v980 = vmul.f32 1.0, %v979
  %982 = vrot.lane.b32.xlu0 %v958, 64
  %v983 = vpop.permute.xlu0 %982
  %v985 = vmul.f32 %v980, %v983
  %987 = vrot.lane.b32.xlu0 %v985, 64
  %v988 = vpop.permute.xlu0 %987
  %v990 = vadd.f32 %v938, %v988
  %v991 = vtanh.pop %v990
  %v992 = vsub.f32 %v860, %v991
  %994 = vrot.lane.b32.xlu0 %v992, 96
  %v995 = vpop.permute.xlu0 %994
  %v997 = vmul.f32 %v980, %v995
  %999 = vrot.lane.b32.xlu0 %v997, 32
  %v1000 = vpop.permute.xlu0 %999
  %v1002 = vadd.f32 %v991, %v1000
  %1004 = vrot.lane.b32.xlu0 %v1002, 64
  %v1005 = vpop.permute.xlu0 %1004
  %1007 = vst.msk [vmem:[#allocation2 + $0x28] sm:$0xff] %vm121, %v1005
  %1008 = vmatpush.bf16.msra.mxu0 0
  %1009 = vmatpush.bf16.msra.mxu0 0
  %1010 = vmatpush.bf16.msra.mxu0 0
  %1011 = vmatpush.bf16.msra.mxu0 0
  %1012 = vmatpush.bf16.msra.mxu0 0
  %1013 = vmatpush.bf16.msra.mxu0 0
  %1014 = vmatpush.bf16.msra.mxu0 %v118
  %1015 = vmatpush.bf16.msra.mxu0 %v117
  %1016 = vmatmul.bf16.gmra.mxu0 %v926
  %v1017 = vpop.f32.mrf.mxu0
  %v1018 = vadd.f32 %v108, %v1017
  %v1019 = vpop.f32.mrf.mxu0
  %1020 = vdwg.mxu0
  %v1021 = vadd.f32 %v100, %v1018
  %v1022 = vxor.u32 %v1021, 2147483648
  %v1023 = vmul.f32 %v1022, 1.442695
  %v1024 = vpow.pop %v1023
  %v1025 = vadd.f32 %v1024, 1.0
  %v1026 = vrcp.pop %v1025
  %v1027 = vmul.f32 %v1025, %v1026
  %v1028 = vsub.f32 1.0, %v1027
  %v1029 = vmul.f32 %v1026, %v1028
  %v1030 = vadd.f32 %v1026, %v1029
  %vm1031 = vweird.f32 %v1025
  %vm1032 = vweird.f32 %v1026
  %vm1033 = vmor %vm1031, %vm1032
  %v1034 = vsel %vm1033, %v1026, %v1030
  %v1035 = vand.u32 2147483647, %v1025
  %vm1036 = vcmp.eq.f32.partialorder %v1035, 8.507059e+37
  %v1037 = vand.u32 %v1025, 2147483648
  %v1038 = vor.u32 1.1754944e-38, %v1037
  %v1039 = vsel %vm1036, %v1038, %v1034
  %v1040 = vmul.f32 1.0, %v1039
  %1042 = vrot.lane.b32.xlu0 %v1018, 64
  %v1043 = vpop.permute.xlu0 %1042
  %v1045 = vmul.f32 %v1040, %v1043
  %1047 = vrot.lane.b32.xlu0 %v1045, 64
  %v1048 = vpop.permute.xlu0 %1047
  %v1050 = vadd.f32 %v100, %v1048
  %v1051 = vtanh.pop %v1050
  %v1052 = vsub.f32 %v920, %v1051
  %1054 = vrot.lane.b32.xlu0 %v1052, 96
  %v1055 = vpop.permute.xlu0 %1054
  %v1057 = vmul.f32 %v1040, %v1055
  %1059 = vrot.lane.b32.xlu0 %v1057, 32
  %v1060 = vpop.permute.xlu0 %1059
  %v1062 = vadd.f32 %v1051, %v1060
  %v1063 = vpack.c.bf16 %v1062, %v1062
  %1065 = vrot.lane.b32.xlu0 %v1063, 64
  %v1066 = vpop.permute.xlu0 %1065
  %v1068 = vsel %vm121, %v1066, 0
  %1070 = vmatpush.bf16.msra.mxu0 0
  %1071 = vmatpush.bf16.msra.mxu0 0
  %1072 = vmatpush.bf16.msra.mxu0 0
  %1073 = vmatpush.bf16.msra.mxu0 0
  %1074 = vmatpush.bf16.msra.mxu0 0
  %1075 = vmatpush.bf16.msra.mxu0 0
  %1076 = vmatpush.bf16.msra.mxu0 %v198
  %1077 = vmatpush.bf16.msra.mxu0 %v197
  %1078 = vmatmul.bf16.gmra.mxu0 %v1068
  %v1079 = vpop.f32.mrf.mxu0
  %v1080 = vadd.f32 %v185, %v1079
  %v1081 = vpop.f32.mrf.mxu0
  %1082 = vdwg.mxu0
  %v1083 = vpack.c.bf16 %v1002, %v1002
  %1085 = vrot.lane.b32.xlu0 %v1083, 64
  %v1086 = vpop.permute.xlu0 %1085
  %v1088 = vsel %vm121, %v1086, 0
  %1090 = vmatpush.bf16.msra.mxu0 0
  %1091 = vmatpush.bf16.msra.mxu0 0
  %1092 = vmatpush.bf16.msra.mxu0 0
  %1093 = vmatpush.bf16.msra.mxu0 0
  %1094 = vmatpush.bf16.msra.mxu0 0
  %1095 = vmatpush.bf16.msra.mxu0 0
  %1096 = vmatpush.bf16.msra.mxu0 %v228
  %1097 = vmatpush.bf16.msra.mxu0 %v227
  %1098 = vmatmul.bf16.gmra.mxu0 %v1088
  %v1099 = vpop.f32.mrf.mxu0
  %v1100 = vadd.f32 %v218, %v1099
  %v1101 = vpop.f32.mrf.mxu0
  %1102 = vdwg.mxu0
  %v1103 = vadd.f32 %v1080, %v1100
  %v1104 = vxor.u32 %v1103, 2147483648
  %v1105 = vmul.f32 %v1104, 1.442695
  %v1106 = vpow.pop %v1105
  %v1107 = vadd.f32 %v1106, 1.0
  %v1108 = vrcp.pop %v1107
  %v1109 = vmul.f32 %v1107, %v1108
  %v1110 = vsub.f32 1.0, %v1109
  %v1111 = vmul.f32 %v1108, %v1110
  %v1112 = vadd.f32 %v1108, %v1111
  %vm1113 = vweird.f32 %v1107
  %vm1114 = vweird.f32 %v1108
  %vm1115 = vmor %vm1113, %vm1114
  %v1116 = vsel %vm1115, %v1108, %v1112
  %v1117 = vand.u32 2147483647, %v1107
  %vm1118 = vcmp.eq.f32.partialorder %v1117, 8.507059e+37
  %v1119 = vand.u32 %v1107, 2147483648
  %v1120 = vor.u32 1.1754944e-38, %v1119
  %v1121 = vsel %vm1118, %v1120, %v1116
  %v1122 = vmul.f32 1.0, %v1121
  %1124 = vrot.lane.b32.xlu0 %v1100, 64
  %v1125 = vpop.permute.xlu0 %1124
  %v1127 = vmul.f32 %v1122, %v1125
  %1129 = vrot.lane.b32.xlu0 %v1127, 64
  %v1130 = vpop.permute.xlu0 %1129
  %v1132 = vadd.f32 %v1080, %v1130
  %v1133 = vtanh.pop %v1132
  %v1134 = vsub.f32 %v1002, %v1133
  %1136 = vrot.lane.b32.xlu0 %v1134, 96
  %v1137 = vpop.permute.xlu0 %1136
  %v1139 = vmul.f32 %v1122, %v1137
  %1141 = vrot.lane.b32.xlu0 %v1139, 32
  %v1142 = vpop.permute.xlu0 %1141
  %v1144 = vadd.f32 %v1133, %v1142
  %1146 = vrot.lane.b32.xlu0 %v1144, 64
  %v1147 = vpop.permute.xlu0 %1146
  %1149 = vst.msk [vmem:[#allocation2 + $0x30] sm:$0xff] %vm121, %v1147
  %1150 = vmatpush.bf16.msra.mxu0 0
  %1151 = vmatpush.bf16.msra.mxu0 0
  %1152 = vmatpush.bf16.msra.mxu0 0
  %1153 = vmatpush.bf16.msra.mxu0 0
  %1154 = vmatpush.bf16.msra.mxu0 0
  %1155 = vmatpush.bf16.msra.mxu0 0
  %1156 = vmatpush.bf16.msra.mxu0 %v118
  %1157 = vmatpush.bf16.msra.mxu0 %v117
  %1158 = vmatmul.bf16.gmra.mxu0 %v1068
  %v1159 = vpop.f32.mrf.mxu0
  %v1160 = vadd.f32 %v108, %v1159
  %v1161 = vpop.f32.mrf.mxu0
  %1162 = vdwg.mxu0
  %v1163 = vadd.f32 %v102, %v1160
  %v1164 = vxor.u32 %v1163, 2147483648
  %v1165 = vmul.f32 %v1164, 1.442695
  %v1166 = vpow.pop %v1165
  %v1167 = vadd.f32 %v1166, 1.0
  %v1168 = vrcp.pop %v1167
  %v1169 = vmul.f32 %v1167, %v1168
  %v1170 = vsub.f32 1.0, %v1169
  %v1171 = vmul.f32 %v1168, %v1170
  %v1172 = vadd.f32 %v1168, %v1171
  %vm1173 = vweird.f32 %v1167
  %vm1174 = vweird.f32 %v1168
  %vm1175 = vmor %vm1173, %vm1174
  %v1176 = vsel %vm1175, %v1168, %v1172
  %v1177 = vand.u32 2147483647, %v1167
  %vm1178 = vcmp.eq.f32.partialorder %v1177, 8.507059e+37
  %v1179 = vand.u32 %v1167, 2147483648
  %v1180 = vor.u32 1.1754944e-38, %v1179
  %v1181 = vsel %vm1178, %v1180, %v1176
  %v1182 = vmul.f32 1.0, %v1181
  %1184 = vrot.lane.b32.xlu0 %v1160, 64
  %v1185 = vpop.permute.xlu0 %1184
  %v1187 = vmul.f32 %v1182, %v1185
  %1189 = vrot.lane.b32.xlu0 %v1187, 64
  %v1190 = vpop.permute.xlu0 %1189
  %v1192 = vadd.f32 %v102, %v1190
  %v1193 = vtanh.pop %v1192
  %v1194 = vsub.f32 %v1062, %v1193
  %1196 = vrot.lane.b32.xlu0 %v1194, 96
  %v1197 = vpop.permute.xlu0 %1196
  %v1199 = vmul.f32 %v1182, %v1197
  %1201 = vrot.lane.b32.xlu0 %v1199, 32
  %v1202 = vpop.permute.xlu0 %1201
  %v1204 = vadd.f32 %v1193, %v1202
  %v1205 = vpack.c.bf16 %v1204, %v1204
  %1207 = vrot.lane.b32.xlu0 %v1205, 64
  %v1208 = vpop.permute.xlu0 %1207
  %v1210 = vsel %vm121, %v1208, 0
  %1212 = vmatpush.bf16.msra.mxu0 0
  %1213 = vmatpush.bf16.msra.mxu0 0
  %1214 = vmatpush.bf16.msra.mxu0 0
  %1215 = vmatpush.bf16.msra.mxu0 0
  %1216 = vmatpush.bf16.msra.mxu0 0
  %1217 = vmatpush.bf16.msra.mxu0 0
  %1218 = vmatpush.bf16.msra.mxu0 %v198
  %1219 = vmatpush.bf16.msra.mxu0 %v197
  %1220 = vmatmul.bf16.gmra.mxu0 %v1210
  %v1221 = vpop.f32.mrf.mxu0
  %v1222 = vadd.f32 %v185, %v1221
  %v1223 = vpop.f32.mrf.mxu0
  %1224 = vdwg.mxu0
  %v1225 = vpack.c.bf16 %v1144, %v1144
  %1227 = vrot.lane.b32.xlu0 %v1225, 64
  %v1228 = vpop.permute.xlu0 %1227
  %v1230 = vsel %vm121, %v1228, 0
  %1232 = vmatpush.bf16.msra.mxu0 0
  %1233 = vmatpush.bf16.msra.mxu0 0
  %1234 = vmatpush.bf16.msra.mxu0 0
  %1235 = vmatpush.bf16.msra.mxu0 0
  %1236 = vmatpush.bf16.msra.mxu0 0
  %1237 = vmatpush.bf16.msra.mxu0 0
  %1238 = vmatpush.bf16.msra.mxu0 %v228
  %1239 = vmatpush.bf16.msra.mxu0 %v227
  %1240 = vmatmul.bf16.gmra.mxu0 %v1230
  %v1241 = vpop.f32.mrf.mxu0
  %v1242 = vadd.f32 %v218, %v1241
  %v1243 = vpop.f32.mrf.mxu0
  %1244 = vdwg.mxu0
  %v1245 = vadd.f32 %v1222, %v1242
  %v1246 = vxor.u32 %v1245, 2147483648
  %v1247 = vmul.f32 %v1246, 1.442695
  %v1248 = vpow.pop %v1247
  %v1249 = vadd.f32 %v1248, 1.0
  %v1250 = vrcp.pop %v1249
  %v1251 = vmul.f32 %v1249, %v1250
  %v1252 = vsub.f32 1.0, %v1251
  %v1253 = vmul.f32 %v1250, %v1252
  %v1254 = vadd.f32 %v1250, %v1253
  %vm1255 = vweird.f32 %v1249
  %vm1256 = vweird.f32 %v1250
  %vm1257 = vmor %vm1255, %vm1256
  %v1258 = vsel %vm1257, %v1250, %v1254
  %v1259 = vand.u32 2147483647, %v1249
  %vm1260 = vcmp.eq.f32.partialorder %v1259, 8.507059e+37
  %v1261 = vand.u32 %v1249, 2147483648
  %v1262 = vor.u32 1.1754944e-38, %v1261
  %v1263 = vsel %vm1260, %v1262, %v1258
  %v1264 = vmul.f32 1.0, %v1263
  %1266 = vrot.lane.b32.xlu0 %v1242, 64
  %v1267 = vpop.permute.xlu0 %1266
  %v1269 = vmul.f32 %v1264, %v1267
  %1271 = vrot.lane.b32.xlu0 %v1269, 64
  %v1272 = vpop.permute.xlu0 %1271
  %v1274 = vadd.f32 %v1222, %v1272
  %v1275 = vtanh.pop %v1274
  %v1276 = vsub.f32 %v1144, %v1275
  %1278 = vrot.lane.b32.xlu0 %v1276, 96
  %v1279 = vpop.permute.xlu0 %1278
  %v1281 = vmul.f32 %v1264, %v1279
  %1283 = vrot.lane.b32.xlu0 %v1281, 32
  %v1284 = vpop.permute.xlu0 %1283
  %v1286 = vadd.f32 %v1275, %v1284
  %1288 = vrot.lane.b32.xlu0 %v1286, 64
  %v1289 = vpop.permute.xlu0 %1288
  %1291 = vst.msk [vmem:[#allocation2 + $0x38] sm:$0xff] %vm121, %v1289
  %v1292 = vld [vmem:[#allocation2] sm:$0xff]
  %v1293 = vld [vmem:[#allocation2 + $0x8] sm:$0xff]
  %v1294 = vld [vmem:[#allocation2 + $0x10] sm:$0xff]
  %v1295 = vld [vmem:[#allocation2 + $0x18] sm:$0xff]
  %v1296 = vld [vmem:[#allocation2 + $0x20] sm:$0xff]
  %v1297 = vld [vmem:[#allocation2 + $0x28] sm:$0xff]
  %v1298 = vld [vmem:[#allocation2 + $0x30] sm:$0xff]
  %v1299 = vld [vmem:[#allocation2 + $0x38] sm:$0xff]
  %v1300 = vpack.c.bf16 %v1293, %v1292
  %v1301 = vpack.c.bf16 %v1295, %v1294
  %v1302 = vpack.c.bf16 %v1297, %v1296
  %v1303 = vpack.c.bf16 %v1299, %v1298
  %v1304 = vperm.slane %v42, 0
  %v1309 = vunpack.c.l.b16 %v34
  %v1310 = vunpack.c.l.b16 %v35
  %v1311 = vunpack.c.l.b16 %v36
  %v1312 = vunpack.c.l.b16 %v37
  %v1313 = vpack.c.b16 %v1310, %v1309
  %v1314 = vpack.c.b16 %v1312, %v1311
  %v1318 = vsel %vm121, %v1300, 0
  %v1321 = vsel %vm121, %v1301, 0
  %v1324 = vsel %vm121, %v1302, 0
  %v1327 = vsel %vm121, %v1303, 0
  %1329 = vmatpush.bf16.msra.mxu0 0
  %1330 = vmatpush.bf16.msra.mxu0 0
  %1331 = vmatpush.bf16.msra.mxu0 0
  %1332 = vmatpush.bf16.msra.mxu0 0
  %1333 = vmatpush.bf16.msra.mxu0 0
  %1334 = vmatpush.bf16.msra.mxu0 0
  %1335 = vmatpush.bf16.msra.mxu0 %v1314
  %1336 = vmatpush.bf16.msra.mxu0 %v1313
  %1337 = vmatmul.bf16.gmra.mxu0 %v1318
  %v1338 = vpop.f32.mrf.mxu0
  %v1339 = vadd.f32 %v1304, %v1338
  %v1340 = vpop.f32.mrf.mxu0
  %v1341 = vadd.f32 %v1304, %v1340
  %1342 = vmatmul.bf16.gmra.mxu0 %v1321
  %v1343 = vpop.f32.mrf.mxu0
  %v1344 = vadd.f32 %v1304, %v1343
  %v1345 = vpop.f32.mrf.mxu0
  %v1346 = vadd.f32 %v1304, %v1345
  %1347 = vmatmul.bf16.gmra.mxu0 %v1324
  %v1348 = vpop.f32.mrf.mxu0
  %v1349 = vadd.f32 %v1304, %v1348
  %v1350 = vpop.f32.mrf.mxu0
  %v1351 = vadd.f32 %v1304, %v1350
  %1352 = vmatmul.bf16.gmra.mxu0 %v1327
  %v1353 = vpop.f32.mrf.mxu0
  %v1354 = vadd.f32 %v1304, %v1353
  %v1355 = vpop.f32.mrf.mxu0
  %v1356 = vadd.f32 %v1304, %v1355
  %1357 = vdwg.mxu0
  %1358 = vst [vmem:[%s4] sm:$0xff] %v1339
  %1359 = vst [vmem:[%s4 + $0x8] sm:$0xff] %v1341
  %1360 = vst [vmem:[%s4 + $0x10] sm:$0xff] %v1344
  %1361 = vst [vmem:[%s4 + $0x18] sm:$0xff] %v1346
  %1362 = vst [vmem:[%s4 + $0x20] sm:$0xff] %v1349
  %1363 = vst [vmem:[%s4 + $0x28] sm:$0xff] %v1351
  %1364 = vst [vmem:[%s4 + $0x30] sm:$0xff] %v1354
  %1365 = vst [vmem:[%s4 + $0x38] sm:$0xff] %v1356
  %1367 = vrot.lane.b32.xlu0 %v1204, 64
  %v1368 = vpop.permute.xlu0 %1367
  %1370 = vst.msk [vmem:[%s5] sm:$0xff] %vm121, %v1368
  %s1371 = scalar_lea.vmem %s5, 8
  %1372 = vst.msk [vmem:[%s1371] sm:$0xff] %vm121, %v1289
  // Predicated region
  $region18: #{rnn_forward.1} parent=0 // pred_check
    _
  $region19: #{rnn_forward.1} parent=0 // pred_check_branch
    %1374 = sbr.rel (0) target = $region21
  $region20: #{rnn_forward.1} parent=0 // pred_region
    _
  $region21: #{rnn_forward.1} parent=0 // pred_fallthru
    _
  // Predicated region
  $region22: #{rnn_forward.1} parent=0 // pred_check
    _
  $region23: #{rnn_forward.1} parent=0 // pred_check_branch
    %1376 = sbr.rel (0) target = $region25
  $region24: #{rnn_forward.1} parent=0 // pred_region
    _
  $region25: #{rnn_forward.1} parent=0 // pred_fallthru
    _
  // Predicated region
  $region26: #{rnn_forward.1} parent=0 // pred_check
    _
  $region27: #{rnn_forward.1} parent=0 // pred_check_branch
    %1378 = sbr.rel (0) target = $region29
  $region28: #{rnn_forward.1} parent=0 // pred_region
    _
  $region29: #{rnn_forward.1} parent=0 // pred_fallthru
    _
  // Predicated region
  $region30: #{rnn_forward.1} parent=0 // pred_check
    _
  $region31: #{rnn_forward.1} parent=0 // pred_check_branch
    %1380 = sbr.rel (0) target = $region33
  $region32: #{rnn_forward.1} parent=0 // pred_region
    _
  $region33: #{rnn_forward.1} parent=0 // pred_fallthru
    _

</llo_original>
